<compile_context>
chip_gen: v5e
topology: v5e:2x2
jax: 0.10.0
libtpu: 0.0.40
codegen_flags: <defaults>
</compile_context>

<pallas_src>
import functools

import jax
import jax.numpy as jnp
import numpy as np
from jax.experimental import pallas as pl
from jax.experimental.pallas import tpu as pltpu


_COMPILER_PARAMS = pltpu.CompilerParams(
    dimension_semantics=("parallel",),
    vmem_limit_bytes=32 * 1024 * 1024,
)


# ----------------------------------------------------------------------------
# In-kernel helpers (operate on VMEM values, NHWC with C on the lane axis).
# ----------------------------------------------------------------------------
def _reflect_pad_hw(x):
    """Reflection-pad-1 (nn.ReflectionPad2d(1)) on a (H, W, C) VMEM value."""
    H, W = x.shape[0], x.shape[1]
    x = jnp.concatenate([x[1:2], x, x[H - 2:H - 1]], axis=0)        # rows
    x = jnp.concatenate([x[:, 1:2], x, x[:, W - 2:W - 1]], axis=1)  # cols
    return x


def _im2col3x3(xp, H, W):
    """(H+2, W+2, C) padded -> (H*W, 9*C) patches, tap-major (dy, dx, c) order."""
    C = xp.shape[-1]
    cols = []
    for dy in range(3):
        for dx in range(3):
            cols.append(xp[dy:dy + H, dx:dx + W, :])
    return jnp.concatenate(cols, axis=-1).reshape(H * W, 9 * C)


def _upsample2x_nn(y):
    """Nearest-neighbour x2 of a (h, w, C) VMEM value -> (2h, 2w, C)."""
    h, w, c = y.shape
    y = jnp.broadcast_to(y[:, None, :, :], (h, 2, w, c)).reshape(2 * h, w, c)
    y = jnp.broadcast_to(y[:, :, None, :], (2 * h, w, 2, c)).reshape(2 * h, 2 * w, c)
    return y


def _elu(x):
    # PyTorch ELU(alpha=1): select, so the exp() of the positive branch is discarded.
    return jnp.where(x > 0, x, jnp.exp(x) - 1.0)


# ----------------------------------------------------------------------------
# Kernel 1: reflection-padded 3x3 conv (+ ELU), im2col single matmul.
# ----------------------------------------------------------------------------
def _conv3x3_kernel(x_ref, w_ref, b_ref, o_ref, *, apply_elu):
    # x_ref: (1, H, W, Cin) bf16 ; w_ref: (9*Cin, Cout) bf16 ; b_ref: (1, Cout) f32
    H, W = x_ref.shape[1], x_ref.shape[2]
    Cout = o_ref.shape[3]
    patches = _im2col3x3(_reflect_pad_hw(x_ref[0]), H, W)           # (H*W, 9*Cin)
    acc = jnp.dot(patches, w_ref[...], preferred_element_type=jnp.float32)
    acc = acc + b_ref[...]
    if apply_elu:
        acc = _elu(acc)
    o_ref[0] = acc.reshape(H, W, Cout).astype(o_ref.dtype)


def conv3x3(x, w_flat, b2, *, apply_elu=True, out_dtype=jnp.bfloat16):
    B, H, W, Cin = x.shape
    Cout = w_flat.shape[1]
    kern = functools.partial(_conv3x3_kernel, apply_elu=apply_elu)
    return pl.pallas_call(
        kern,
        out_shape=jax.ShapeDtypeStruct((B, H, W, Cout), out_dtype),
        grid=(B,),
        in_specs=[
            pl.BlockSpec((1, H, W, Cin), lambda bi: (bi, 0, 0, 0)),
            pl.BlockSpec((9 * Cin, Cout), lambda bi: (0, 0)),
            pl.BlockSpec((1, Cout), lambda bi: (0, 0)),
        ],
        out_specs=pl.BlockSpec((1, H, W, Cout), lambda bi: (bi, 0, 0, 0)),
        compiler_params=_COMPILER_PARAMS,
    )(x, w_flat, b2)


# ----------------------------------------------------------------------------
# Kernel 2: fused nearest-2x upsample + reflect-pad 3x3 conv + ELU (no skip).
# ----------------------------------------------------------------------------
def _up_conv3x3_kernel(y_ref, w_ref, b_ref, o_ref):
    h, w = y_ref.shape[1], y_ref.shape[2]
    H, W = 2 * h, 2 * w
    Cout = o_ref.shape[3]
    x_up = _upsample2x_nn(y_ref[0])
    acc = jnp.dot(_im2col3x3(_reflect_pad_hw(x_up), H, W), w_ref[...],
                  preferred_element_type=jnp.float32)
    acc = _elu(acc + b_ref[...])
    o_ref[0] = acc.reshape(H, W, Cout).astype(o_ref.dtype)


def up_conv3x3(y, w_flat, b2, out_dtype=jnp.bfloat16):
    B, h, w, Cy = y.shape
    Cout = w_flat.shape[1]
    H, W = 2 * h, 2 * w
    return pl.pallas_call(
        _up_conv3x3_kernel,
        out_shape=jax.ShapeDtypeStruct((B, H, W, Cout), out_dtype),
        grid=(B,),
        in_specs=[
            pl.BlockSpec((1, h, w, Cy), lambda bi: (bi, 0, 0, 0)),
            pl.BlockSpec((9 * Cy, Cout), lambda bi: (0, 0)),
            pl.BlockSpec((1, Cout), lambda bi: (0, 0)),
        ],
        out_specs=pl.BlockSpec((1, H, W, Cout), lambda bi: (bi, 0, 0, 0)),
        compiler_params=_COMPILER_PARAMS,
    )(y, w_flat, b2)


# ----------------------------------------------------------------------------
# Kernel 3: fused nearest-2x upsample + skip concat + reflect-pad 3x3 conv + ELU.
# The channel concat is replaced by two matmuls (weight split) into one accumulator.
# ----------------------------------------------------------------------------
def _up_cat_conv3x3_kernel(y_ref, s_ref, wy_ref, ws_ref, b_ref, o_ref):
    h, w = y_ref.shape[1], y_ref.shape[2]
    H, W = 2 * h, 2 * w
    Cout = o_ref.shape[3]
    x_up = _upsample2x_nn(y_ref[0])
    acc = jnp.dot(_im2col3x3(_reflect_pad_hw(x_up), H, W), wy_ref[...],
                  preferred_element_type=jnp.float32)
    acc = acc + jnp.dot(_im2col3x3(_reflect_pad_hw(s_ref[0]), H, W), ws_ref[...],
                        preferred_element_type=jnp.float32)
    acc = _elu(acc + b_ref[...])
    o_ref[0] = acc.reshape(H, W, Cout).astype(o_ref.dtype)


def up_cat_conv3x3(y, skip, wy, ws, b2, out_dtype=jnp.bfloat16):
    B, h, w, Cy = y.shape
    _, H, W, Cs = skip.shape
    Cout = wy.shape[1]
    return pl.pallas_call(
        _up_cat_conv3x3_kernel,
        out_shape=jax.ShapeDtypeStruct((B, H, W, Cout), out_dtype),
        grid=(B,),
        in_specs=[
            pl.BlockSpec((1, h, w, Cy), lambda bi: (bi, 0, 0, 0)),
            pl.BlockSpec((1, H, W, Cs), lambda bi: (bi, 0, 0, 0)),
            pl.BlockSpec((9 * Cy, Cout), lambda bi: (0, 0)),
            pl.BlockSpec((9 * Cs, Cout), lambda bi: (0, 0)),
            pl.BlockSpec((1, Cout), lambda bi: (0, 0)),
        ],
        out_specs=pl.BlockSpec((1, H, W, Cout), lambda bi: (bi, 0, 0, 0)),
        compiler_params=_COMPILER_PARAMS,
    )(y, skip, wy, ws, b2)


# ----------------------------------------------------------------------------
# Kernel 4: fused dispconv (reflect-pad 3x3) + per-pixel softmax over plane
# levels + disparity-weighted reduction + depth.  Logits never leave VMEM
# before the softmax; reciprocals run on the EUP.
# ----------------------------------------------------------------------------
def _dispconv_head_kernel(x_ref, w_ref, b_ref, dvec_ref,
                          logits_ref, prob_ref, disp_ref, depth_ref, *, width):
    H, W = x_ref.shape[1], x_ref.shape[2]
    L = logits_ref.shape[3]
    patches = _im2col3x3(_reflect_pad_hw(x_ref[0]), H, W)           # (H*W, 9*Cin)
    logits = jnp.dot(patches, w_ref[...], preferred_element_type=jnp.float32)
    logits = logits + b_ref[...]                                    # (H*W, L)
    # padding_mask is all-ones in this configuration => logits unchanged.
    m = jnp.max(logits, axis=-1, keepdims=True)
    e = jnp.exp(logits - m)
    s = jnp.sum(e, axis=-1, keepdims=True)
    p = e * pl.reciprocal(s, approx=True)                           # softmax
    d = jnp.sum(p * dvec_ref[...], axis=-1, keepdims=True)          # (H*W, 1)
    logits_ref[0] = logits.reshape(H, W, L)
    prob_ref[0] = p.reshape(H, W, L)
    disp_ref[0] = d.reshape(H, W, 1)
    depth_ref[0] = ((0.1 * 0.58 * width)
                    * pl.reciprocal(d, approx=True)).reshape(H, W, 1)


def dispconv_softmax_head(x, w_flat, b2, disp_vec, width):
    B, H, W, Cin = x.shape
    L = w_flat.shape[1]
    kern = functools.partial(_dispconv_head_kernel, width=float(width))
    return pl.pallas_call(
        kern,
        out_shape=(
            jax.ShapeDtypeStruct((B, H, W, L), jnp.float32),
            jax.ShapeDtypeStruct((B, H, W, L), jnp.float32),
            jax.ShapeDtypeStruct((B, H, W, 1), jnp.float32),
            jax.ShapeDtypeStruct((B, H, W, 1), jnp.float32),
        ),
        grid=(B,),
        in_specs=[
            pl.BlockSpec((1, H, W, Cin), lambda bi: (bi, 0, 0, 0)),
            pl.BlockSpec((9 * Cin, L), lambda bi: (0, 0)),
            pl.BlockSpec((1, L), lambda bi: (0, 0)),
            pl.BlockSpec((1, L), lambda bi: (0, 0)),
        ],
        out_specs=(
            pl.BlockSpec((1, H, W, L), lambda bi: (bi, 0, 0, 0)),
            pl.BlockSpec((1, H, W, L), lambda bi: (bi, 0, 0, 0)),
            pl.BlockSpec((1, H, W, 1), lambda bi: (bi, 0, 0, 0)),
            pl.BlockSpec((1, H, W, 1), lambda bi: (bi, 0, 0, 0)),
        ),
        compiler_params=_COMPILER_PARAMS,
    )(x, w_flat, b2, disp_vec.reshape(1, L).astype(jnp.float32))


# ----------------------------------------------------------------------------
# DepthDecoder wrapper (parameter construction + forward orchestration).
# ----------------------------------------------------------------------------
class DepthDecoderPallas:
    def __init__(self, num_ch_enc, no_levels=49, disp_min=2, disp_max=300,
                 use_skips=True, key=None):
        self.num_ch_enc = list(num_ch_enc)
        self.num_ch_dec = np.array([16, 32, 64, 128, 256])
        self.no_levels = no_levels
        self.disp_min = disp_min
        self.disp_max = disp_max
        self.use_skips = use_skips

        if key is None:
            key = jax.random.PRNGKey(0)

        self.params = {}

        def make_conv(k, cin, cout):
            kw, kb = jax.random.split(k)
            w = 0.05 * jax.random.normal(kw, (3, 3, cin, cout), jnp.float32)
            b = 0.05 * jax.random.normal(kb, (cout,), jnp.float32)
            return w, b

        keys = jax.random.split(key, 11)
        ki = 0
        for i in range(4, -1, -1):
            cin = self.num_ch_enc[-1] if i == 4 else int(self.num_ch_dec[i + 1])
            cout = int(self.num_ch_dec[i])
            w, b = make_conv(keys[ki], cin, cout); ki += 1
            self.params[("upconv", i, 0)] = (
                w.reshape(9 * cin, cout).astype(jnp.bfloat16),
                b.reshape(1, cout))

            cy = int(self.num_ch_dec[i])
            cs = self.num_ch_enc[i - 1] if (self.use_skips and i > 0) else 0
            w, b = make_conv(keys[ki], cy + cs, cout); ki += 1
            wy = w[:, :, :cy, :].reshape(9 * cy, cout).astype(jnp.bfloat16)
            ws = (w[:, :, cy:, :].reshape(9 * cs, cout).astype(jnp.bfloat16)
                  if cs > 0 else None)
            self.params[("upconv", i, 1)] = (wy, ws, b.reshape(1, cout))

        cin = int(self.num_ch_dec[0])
        w, b = make_conv(keys[ki], cin, self.no_levels)
        self.params["dispconv"] = (
            w.reshape(9 * cin, self.no_levels).astype(jnp.bfloat16),
            b.reshape(1, self.no_levels))

    def forward(self, input_features):
        # input_features: list of 5 NCHW arrays (encoder pyramid, coarse = last).
        # NHWC + bf16 for all intermediate activations (f32 accumulate in kernels).
        feats = [jnp.transpose(f, (0, 2, 3, 1)).astype(jnp.bfloat16)
                 for f in input_features]

        x = feats[-1]
        for i in range(4, -1, -1):
            w0, b0 = self.params[("upconv", i, 0)]
            x = conv3x3(x, w0, b0, apply_elu=True)
            wy, ws, b1 = self.params[("upconv", i, 1)]
            if self.use_skips and i > 0:
                x = up_cat_conv3x3(x, feats[i - 1], wy, ws, b1)
            else:
                x = up_conv3x3(x, wy, b1)

        B, H, W, _ = x.shape

        # Layered disparities: spatially constant per level.
        levels = jnp.arange(self.no_levels, dtype=jnp.float32)
        disp_vec = self.disp_max * (self.disp_min / self.disp_max) ** (
            levels / (self.no_levels - 1))

        wd, bd = self.params["dispconv"]
        logits, prob, disp, depth = dispconv_softmax_head(x, wd, bd, disp_vec, W)

        outputs = {}
        outputs["distance"] = jnp.broadcast_to(
            (0.1 * 0.58 * W / disp_vec)[None, :], (B, self.no_levels))
        outputs["norm"] = jnp.broadcast_to(
            jnp.array([0.0, 0.0, 1.0], jnp.float32)[None, None, :],
            (B, self.no_levels, 3))
        outputs["disp_layered"] = jnp.broadcast_to(
            disp_vec[None, :, None, None], (B, self.no_levels, H, W))
        outputs["padding_mask"] = jnp.ones((B, self.no_levels, H, W),
                                           jnp.float32)
        # TODO(synk): have the head kernel emit NCHW directly via its out_spec
        #             to avoid these relayouts if downstream consumers need NCHW.
        outputs["logits"] = jnp.transpose(logits, (0, 3, 1, 2))
        outputs["probability"] = jnp.transpose(prob, (0, 3, 1, 2))
        outputs["disp"] = jnp.transpose(disp, (0, 3, 1, 2))
        outputs["depth"] = jnp.transpose(depth, (0, 3, 1, 2))
        return outputs


if __name__ == "__main__":
    key = jax.random.PRNGKey(0)
    B = 2
    H = W = 64                          # full output resolution
    num_ch_enc = [16, 24, 40, 64, 128]  # encoder pyramid channels

    dec = DepthDecoderPallas(num_ch_enc, key=jax.random.PRNGKey(0))

    feat_keys = jax.random.split(key, len(num_ch_enc))
    input_features = []
    for i, c in enumerate(num_ch_enc):
        s = H // (2 ** (i + 1))         # H/2, H/4, H/8, H/16, H/32
        input_features.append(
            jax.random.normal(feat_keys[i], (B, c, s, s), jnp.float32))

    outputs = dec.forward(input_features)
    jax.block_until_ready(outputs)

    assert outputs["logits"].shape == (B, 49, H, W)
    assert outputs["probability"].shape == (B, 49, H, W)
    assert outputs["disp"].shape == (B, 1, H, W)
    assert outputs["depth"].shape == (B, 1, H, W)
    print("KERNEL_OK")
</pallas_src>

<mosaic_0001>
module attributes {stable_mosaic.version = 11 : i64} {
  func.func @_conv3x3_kernel(%arg0: i32, %arg1: memref<1x2x2x128xbf16, #tpu.memory_space<vmem>>, %arg2: memref<1152x256xbf16, #tpu.memory_space<vmem>>, %arg3: memref<1x256xf32, #tpu.memory_space<vmem>>, %arg4: memref<1x2x2x256xbf16, #tpu.memory_space<vmem>>) attributes {dimension_semantics = [#tpu.dimension_semantics<parallel>], iteration_bounds = array<i64: 2>, scalar_prefetch = 0 : i64, scratch_operands = 0 : i64, tpu.core_type = #tpu.core_type<tc>, window_params = [{transform_indices = @transform_0, window_bounds = array<i64: 1, 2, 2, 128>}, {pipeline_mode = #tpu.pipeline_mode<synchronous>, transform_indices = @transform_1, window_bounds = array<i64: 1152, 256>}, {pipeline_mode = #tpu.pipeline_mode<synchronous>, transform_indices = @transform_2, window_bounds = array<i64: 1, 256>}, {transform_indices = @transform_3, window_bounds = array<i64: 1, 2, 2, 256>}]} {
    %c0 = arith.constant 0 : index
    %c0_0 = arith.constant 0 : index
    %c0_1 = arith.constant 0 : index
    %c0_2 = arith.constant 0 : index
    %0 = vector.load %arg1[%c0, %c0_0, %c0_1, %c0_2] : memref<1x2x2x128xbf16, #tpu.memory_space<vmem>>, vector<1x2x2x128xbf16>
    %1 = vector.shape_cast %0 : vector<1x2x2x128xbf16> to vector<2x2x128xbf16>
    %2 = vector.extract_strided_slice %1 {offsets = [1, 0, 0], sizes = [1, 2, 128], strides = [1, 1, 1]} : vector<2x2x128xbf16> to vector<1x2x128xbf16>
    %3 = vector.extract_strided_slice %1 {offsets = [0, 0, 0], sizes = [1, 2, 128], strides = [1, 1, 1]} : vector<2x2x128xbf16> to vector<1x2x128xbf16>
    %4 = tpu.concatenate %2, %1, %3 in 0 : vector<1x2x128xbf16>, vector<2x2x128xbf16>, vector<1x2x128xbf16> -> vector<4x2x128xbf16>
    %5 = vector.extract_strided_slice %4 {offsets = [0, 1, 0], sizes = [4, 1, 128], strides = [1, 1, 1]} : vector<4x2x128xbf16> to vector<4x1x128xbf16>
    %6 = vector.extract_strided_slice %4 {offsets = [0, 0, 0], sizes = [4, 1, 128], strides = [1, 1, 1]} : vector<4x2x128xbf16> to vector<4x1x128xbf16>
    %7 = tpu.concatenate %5, %4, %6 in 1 : vector<4x1x128xbf16>, vector<4x2x128xbf16>, vector<4x1x128xbf16> -> vector<4x4x128xbf16>
    %8 = vector.extract_strided_slice %7 {offsets = [0, 0, 0], sizes = [2, 2, 128], strides = [1, 1, 1]} : vector<4x4x128xbf16> to vector<2x2x128xbf16>
    %9 = vector.extract_strided_slice %7 {offsets = [0, 1, 0], sizes = [2, 2, 128], strides = [1, 1, 1]} : vector<4x4x128xbf16> to vector<2x2x128xbf16>
    %10 = vector.extract_strided_slice %7 {offsets = [0, 2, 0], sizes = [2, 2, 128], strides = [1, 1, 1]} : vector<4x4x128xbf16> to vector<2x2x128xbf16>
    %11 = vector.extract_strided_slice %7 {offsets = [1, 0, 0], sizes = [2, 2, 128], strides = [1, 1, 1]} : vector<4x4x128xbf16> to vector<2x2x128xbf16>
    %12 = vector.extract_strided_slice %7 {offsets = [1, 1, 0], sizes = [2, 2, 128], strides = [1, 1, 1]} : vector<4x4x128xbf16> to vector<2x2x128xbf16>
    %13 = vector.extract_strided_slice %7 {offsets = [1, 2, 0], sizes = [2, 2, 128], strides = [1, 1, 1]} : vector<4x4x128xbf16> to vector<2x2x128xbf16>
    %14 = vector.extract_strided_slice %7 {offsets = [2, 0, 0], sizes = [2, 2, 128], strides = [1, 1, 1]} : vector<4x4x128xbf16> to vector<2x2x128xbf16>
    %15 = vector.extract_strided_slice %7 {offsets = [2, 1, 0], sizes = [2, 2, 128], strides = [1, 1, 1]} : vector<4x4x128xbf16> to vector<2x2x128xbf16>
    %16 = vector.extract_strided_slice %7 {offsets = [2, 2, 0], sizes = [2, 2, 128], strides = [1, 1, 1]} : vector<4x4x128xbf16> to vector<2x2x128xbf16>
    %17 = tpu.concatenate %8, %9, %10, %11, %12, %13, %14, %15, %16 in 2 : vector<2x2x128xbf16>, vector<2x2x128xbf16>, vector<2x2x128xbf16>, vector<2x2x128xbf16>, vector<2x2x128xbf16>, vector<2x2x128xbf16>, vector<2x2x128xbf16>, vector<2x2x128xbf16>, vector<2x2x128xbf16> -> vector<2x2x1152xbf16>
    %18 = vector.shape_cast %17 : vector<2x2x1152xbf16> to vector<4x1152xbf16>
    %c0_3 = arith.constant 0 : index
    %c0_4 = arith.constant 0 : index
    %19 = vector.load %arg2[%c0_3, %c0_4] : memref<1152x256xbf16, #tpu.memory_space<vmem>>, vector<1152x256xbf16>
    %cst = arith.constant dense<0.000000e+00> : vector<4x256xf32>
    %20 = tpu.matmul %18, %19, %cst {dimension_numbers = #tpu.dot_dimension_numbers<[1], [0], [0], [1], [0, 0, 1, 1], [], []>} : vector<4x1152xbf16>, vector<1152x256xbf16>, vector<4x256xf32> -> vector<4x256xf32>
    %c0_5 = arith.constant 0 : index
    %c0_6 = arith.constant 0 : index
    %21 = vector.load %arg3[%c0_5, %c0_6] : memref<1x256xf32, #tpu.memory_space<vmem>>, vector<1x256xf32>
    %22 = vector.broadcast %21 : vector<1x256xf32> to vector<4x256xf32>
    %23 = arith.addf %20, %22 : vector<4x256xf32>
    %cst_7 = arith.constant 0.000000e+00 : f32
    %24 = vector.broadcast %cst_7 : f32 to vector<4x256xf32>
    %25 = arith.cmpf ogt, %23, %24 : vector<4x256xf32>
    %26 = math.exp %23 : vector<4x256xf32>
    %cst_8 = arith.constant 1.000000e+00 : f32
    %27 = vector.broadcast %cst_8 : f32 to vector<4x256xf32>
    %28 = arith.subf %26, %27 : vector<4x256xf32>
    %29 = arith.select %25, %23, %28 : vector<4x256xi1>, vector<4x256xf32>
    %30 = vector.shape_cast %29 : vector<4x256xf32> to vector<2x2x256xf32>
    %31 = arith.truncf %30 : vector<2x2x256xf32> to vector<2x2x256xbf16>
    %c0_9 = arith.constant 0 : index
    %c0_10 = arith.constant 0 : index
    %c0_11 = arith.constant 0 : index
    %c0_12 = arith.constant 0 : index
    %32 = vector.load %arg4[%c0_9, %c0_10, %c0_11, %c0_12] : memref<1x2x2x256xbf16, #tpu.memory_space<vmem>>, vector<1x2x2x256xbf16>
    %33 = vector.shape_cast %32 : vector<1x2x2x256xbf16> to vector<2x2x256xbf16>
    %34 = vector.shape_cast %31 : vector<2x2x256xbf16> to vector<1x2x2x256xbf16>
    tpu.vector_store %arg4[%c0_9, %c0_10, %c0_11, %c0_12], %34 {strides = array<i32>} : memref<1x2x2x256xbf16, #tpu.memory_space<vmem>>, vector<1x2x2x256xbf16>,
    return
  }
  func.func @transform_0(%arg0: i32) -> (i32, i32, i32, i32) {
    %c0_i32 = arith.constant 0 : i32
    %c0_i32_0 = arith.constant 0 : i32
    %c0_i32_1 = arith.constant 0 : i32
    %c0_i32_2 = arith.constant 0 : i32
    return %arg0, %c0_i32, %c0_i32_0, %c0_i32_1 : i32, i32, i32, i32
  }
  func.func @transform_1(%arg0: i32) -> (i32, i32) {
    %c0_i32 = arith.constant 0 : i32
    %c0_i32_0 = arith.constant 0 : i32
    %c0_i32_1 = arith.constant 0 : i32
    return %c0_i32, %c0_i32_0 : i32, i32
  }
  func.func @transform_2(%arg0: i32) -> (i32, i32) {
    %c0_i32 = arith.constant 0 : i32
    %c0_i32_0 = arith.constant 0 : i32
    %c0_i32_1 = arith.constant 0 : i32
    return %c0_i32, %c0_i32_0 : i32, i32
  }
  func.func @transform_3(%arg0: i32) -> (i32, i32, i32, i32) {
    %c0_i32 = arith.constant 0 : i32
    %c0_i32_0 = arith.constant 0 : i32
    %c0_i32_1 = arith.constant 0 : i32
    %c0_i32_2 = arith.constant 0 : i32
    return %arg0, %c0_i32, %c0_i32_0, %c0_i32_1 : i32, i32, i32, i32
  }
}

</mosaic_0001>

<llo_original>
// kernel: tpu_custom_call.1
$region0: #{tpu_custom_call.1}
  #allocation0 [shape = 'u32[]', space=smem, size = 0x4, offset = 0x4, fixed_abs, tag = 'smem constant byte address 0x4 - core index']
  #allocation1 [shape = 'u32[72,128]{1,0:T(1,128)}', space=vmem, size = 0x9000, scoped, tag = 'internal scratch']
  %s0 = inlined_call_operand.hbm [shape: bf16[2,2,2,128], index: 0, kind: input, shape index: {}]
  %s1 = inlined_call_operand.hbm [shape: bf16[1152,256], index: 1, kind: input, shape index: {}]
  %s2 = inlined_call_operand.hbm [shape: f32[1,256], index: 2, kind: input, shape index: {}]
  %s3 = inlined_call_operand.hbm [shape: bf16[2,2,2,256], index: 3, kind: output, shape index: {}]
  %s4 = sld [smem:[#allocation0]]
  $region57: #{tpu_custom_call.1} parent=0
    _
  %s6 = ssub.s32 1, %s4
  %s7 = scalar_select 0, %s6, %s4
  $region1: #{tpu_custom_call.1} parent=0
    #allocation2 [shape = 'u8[2048]{0}', space=vmem, size = 0x800, scoped, tag = 'input window, operand 0']
    #allocation3 [shape = 's32[2]{0}', space=sflag, size = 0x8, scoped, tag = 'scoped memory for tpu_custom_call.1']
    #allocation4 [shape = 's32[2]{0}', space=sflag, size = 0x8, scoped, tag = 'scoped memory for tpu_custom_call.1']
    #allocation5 [shape = 'u8[589824]{0}', space=vmem, size = 0x90000, scoped, tag = 'input window, operand 1, single buffered']
    #allocation6 [shape = 's32[1]{0}', space=sflag, size = 0x4, scoped, tag = 'scoped memory for tpu_custom_call.1']
    #allocation7 [shape = 'u8[1024]{0}', space=vmem, size = 0x400, scoped, tag = 'input window, operand 2, single buffered']
    #allocation8 [shape = 'u8[4096]{0}', space=vmem, size = 0x1000, scoped, tag = 'output window, operand 0']
    %8 = vsyncpa [#allocation3], 0
    %s9 = scalar_lea.sflag [#allocation3], 1
    %10 = vsyncpa %s9, 0
    %11 = vsyncpa [#allocation6], 0
    %12 = vsyncpa [#allocation4], 0
    %s13 = scalar_lea.sflag [#allocation4], 1
    %14 = vsyncpa %s13, 0
    loop: start=0, step=1, limit=4
    $region2: #{tpu_custom_call.1} parent=1 // loop_pre_header
      _
    $region3: #{tpu_custom_call.1} parent=1 // loop_header
      %s16 = sphi 0, %s20
      %p17 = scmp.ge.s32.totalorder %s16, 4
      %s26 = sphi 0, %s28
      %s29 = sphi 0, %s26
      %s30 = sphi 0, %s29
      %s46 = sphi 0, %s30
      %s50 = sphi 0, %s50
      %s52 = sphi 0, %s50
      %s53 = sphi 0, %s52
      %s67 = sphi 0, %s53
      %s71 = sphi 0, %s71
      %s73 = sphi 0, %s71
      %s74 = sphi 0, %s73
      %s88 = sphi 0, %s74
      %s94 = sphi 0, %s96
      %s97 = sphi 0, %s94
      %s98 = sphi 0, %s97
      %s114 = sphi 0, %s98
    $region4: #{tpu_custom_call.1} parent=1 // loop_header_branch
      %19 = sbr.rel (%p17) target = $region8
    $region5: #{tpu_custom_call.1} parent=1 // loop_body
      %s21 = ssub.s32 %s16, 1
      %s22 = ssub.s32 %s16, 2
      %s23 = sadd.s32 %s16, 1
      %s24 = ssub.s32 %s16, %s23
      %p25 = scmp.eq.s32.totalorder %s24, 0
      %s27 = sadd.s32 %s26, 1
      %s28 = scalar_select %p25, %s26, %s27
      %p31 = pneg %p25
      %p32 = scmp.eq.s32.totalorder %s16, 1
      %p33 = por %p31, %p32
      %p34 = scmp.ne.s32.totalorder %s26, %s29
      %p35 = scmp.eq.s32.totalorder %s16, 0
      %p36 = por %p34, %p35
      %p37 = scmp.ne.s32.totalorder %s26, %s29
      %p38 = scmp.eq.s32.totalorder %s21, 1
      %p39 = por %p37, %p38
      %p40 = scmp.ne.s32.totalorder %s29, %s30
      %p41 = scmp.eq.s32.totalorder %s21, 0
      %p42 = por %p40, %p41
      %p43 = scmp.ne.s32.totalorder %s29, %s30
      %p44 = scmp.eq.s32.totalorder %s22, 1
      %p45 = por %p43, %p44
      %p47 = scmp.ne.s32.totalorder %s30, %s46
      %p48 = scmp.eq.s32.totalorder %s22, 0
      %p49 = por %p47, %p48
      %s51 = sadd.s32 %s50, 1
      %p54 = scmp.eq.s32.totalorder %s16, 1
      %p55 = scmp.ne.s32.totalorder %s50, %s52
      %p56 = scmp.eq.s32.totalorder %s16, 0
      %p57 = por %p55, %p56
      %p58 = scmp.ne.s32.totalorder %s50, %s52
      %p59 = scmp.eq.s32.totalorder %s21, 1
      %p60 = por %p58, %p59
      %p61 = scmp.ne.s32.totalorder %s52, %s53
      %p62 = scmp.eq.s32.totalorder %s21, 0
      %p63 = por %p61, %p62
      %p64 = scmp.ne.s32.totalorder %s52, %s53
      %p65 = scmp.eq.s32.totalorder %s22, 1
      %p66 = por %p64, %p65
      %p68 = scmp.ne.s32.totalorder %s53, %s67
      %p69 = scmp.eq.s32.totalorder %s22, 0
      %p70 = por %p68, %p69
      %s72 = sadd.s32 %s71, 1
      %p75 = scmp.eq.s32.totalorder %s16, 1
      %p76 = scmp.ne.s32.totalorder %s71, %s73
      %p77 = scmp.eq.s32.totalorder %s16, 0
      %p78 = por %p76, %p77
      %p79 = scmp.ne.s32.totalorder %s71, %s73
      %p80 = scmp.eq.s32.totalorder %s21, 1
      %p81 = por %p79, %p80
      %p82 = scmp.ne.s32.totalorder %s73, %s74
      %p83 = scmp.eq.s32.totalorder %s21, 0
      %p84 = por %p82, %p83
      %p85 = scmp.ne.s32.totalorder %s73, %s74
      %p86 = scmp.eq.s32.totalorder %s22, 1
      %p87 = por %p85, %p86
      %p89 = scmp.ne.s32.totalorder %s74, %s88
      %p90 = scmp.eq.s32.totalorder %s22, 0
      %p91 = por %p89, %p90
      %s92 = ssub.s32 %s16, %s23
      %p93 = scmp.eq.s32.totalorder %s92, 0
      %s95 = sadd.s32 %s94, 1
      %s96 = scalar_select %p93, %s94, %s95
      %p99 = pneg %p93
      %p100 = scmp.eq.s32.totalorder %s16, 1
      %p101 = por %p99, %p100
      %p102 = scmp.ne.s32.totalorder %s94, %s97
      %p103 = scmp.eq.s32.totalorder %s16, 0
      %p104 = por %p102, %p103
      %p105 = scmp.ne.s32.totalorder %s94, %s97
      %p106 = scmp.eq.s32.totalorder %s21, 1
      %p107 = por %p105, %p106
      %p108 = scmp.ne.s32.totalorder %s97, %s98
      %p109 = scmp.eq.s32.totalorder %s21, 0
      %p110 = por %p108, %p109
      %p111 = scmp.ne.s32.totalorder %s97, %s98
      %p112 = scmp.eq.s32.totalorder %s22, 1
      %p113 = por %p111, %p112
      %p115 = scmp.ne.s32.totalorder %s98, %s114
      %p116 = scmp.eq.s32.totalorder %s22, 0
      %p117 = por %p115, %p116
      %p118 = scmp.le.s32.totalorder 1, %s16
      %p119 = scmp.lt.s32.totalorder %s16, 3
      %p120 = pnand %p118, %p119
      %p121 = pneg %p120
      // Predicated region
      $region9: #{tpu_custom_call.1} parent=5 // pred_check
        _
      $region10: #{tpu_custom_call.1} parent=5 // pred_check_branch
        %123 = sbr.rel (%p120) target = $region12
      $region11: #{tpu_custom_call.1} parent=5 // pred_region
        %s124 = ssub.s32 %s16, 1
        // Predicated region
        $region13: #{tpu_custom_call.1} parent=11 // pred_check
          %p125 = pneg %p63
        $region14: #{tpu_custom_call.1} parent=11 // pred_check_branch
          %127 = sbr.rel (%p125) target = $region16
        $region15: #{tpu_custom_call.1} parent=11 // pred_region
          %129 = vsyncadd [#allocation6], 0
          %s130 = sshll.u32 %s1, 4
          %s131 = int_to_ptr.hbm [resolvable:$true] %s130
          %s132 = sshll.u32 [#allocation5], 4
          %s133 = int_to_ptr.vmem [resolvable:$true] %s132
          %138 = dma.hbm_to_vmem [thread:$0]  %s131, 18432, %s133, [#allocation6], 128, 128, 8
        $region16: #{tpu_custom_call.1} parent=11 // pred_fallthru
          _
        // Predicated region
        $region17: #{tpu_custom_call.1} parent=11 // pred_check
          %p139 = pneg %p84
        $region18: #{tpu_custom_call.1} parent=11 // pred_check_branch
          %141 = sbr.rel (%p139) target = $region20
        $region19: #{tpu_custom_call.1} parent=11 // pred_region
          %143 = vsyncadd [#allocation6], 0
          %s145 = sshll.u32 %s2, 4
          %s146 = int_to_ptr.hbm [resolvable:$true] %s145
          %s147 = sshll.u32 [#allocation7], 4
          %s148 = int_to_ptr.vmem [resolvable:$true] %s147
          %150 = dma.hbm_to_vmem [thread:$0]  %s146, 32, %s148, [#allocation6]
        $region20: #{tpu_custom_call.1} parent=11 // pred_fallthru
          _
      $region12: #{tpu_custom_call.1} parent=5 // pred_fallthru
        _
      %p151 = scmp.lt.s32.totalorder %s16, 2
      // Predicated region
      $region21: #{tpu_custom_call.1} parent=5 // pred_check
        %p152 = pneg %p151
      $region22: #{tpu_custom_call.1} parent=5 // pred_check_branch
        %154 = sbr.rel (%p152) target = $region24
      $region23: #{tpu_custom_call.1} parent=5 // pred_region
        // Predicated region
        $region25: #{tpu_custom_call.1} parent=23 // pred_check
          %p155 = pneg %p36
        $region26: #{tpu_custom_call.1} parent=23 // pred_check_branch
          %157 = sbr.rel (%p155) target = $region28
        $region27: #{tpu_custom_call.1} parent=23 // pred_region
          %s158 = sand.u32 %s26, 1
          %s159 = scalar_lea.sflag [#allocation3], %s158
          %s160 = sand.u32 %s26, 1
          %s161 = smul.addr %s160, 2
          %s162 = scalar_lea.vmem [#allocation2], %s161
          %164 = vsyncadd %s159, 0
          %s165 = smul.addr %s16, 2
          %s166 = scalar_lea.hbm %s0, %s165
          %s167 = sshll.u32 %s166, 4
          %s168 = int_to_ptr.hbm [resolvable:$true] %s167
          %s169 = sshll.u32 %s162, 4
          %s170 = int_to_ptr.vmem [resolvable:$true] %s169
          %175 = dma.hbm_to_vmem [thread:$0]  %s168, 32, %s170, %s159, 16, 16, 1
        $region28: #{tpu_custom_call.1} parent=23 // pred_fallthru
          _
      $region24: #{tpu_custom_call.1} parent=5 // pred_fallthru
        _
      %p176 = scmp.le.s32.totalorder 1, %s16
      %p177 = scmp.lt.s32.totalorder %s16, 3
      %p178 = pnand %p176, %p177
      %p179 = pneg %p178
      // Predicated region
      $region29: #{tpu_custom_call.1} parent=5 // pred_check
        _
      $region30: #{tpu_custom_call.1} parent=5 // pred_check_branch
        %181 = sbr.rel (%p178) target = $region32
      $region31: #{tpu_custom_call.1} parent=5 // pred_region
        %s182 = ssub.s32 %s16, 1
        %s183 = sand.u32 %s29, 1
        %s184 = scalar_lea.sflag [#allocation3], %s183
        %s185 = sand.u32 %s29, 1
        %s186 = smul.addr %s185, 2
        %s187 = scalar_lea.vmem [#allocation2], %s186
        // Predicated region
        $region33: #{tpu_custom_call.1} parent=31 // pred_check
          %p188 = pneg %p42
        $region34: #{tpu_custom_call.1} parent=31 // pred_check_branch
          %190 = sbr.rel (%p188) target = $region36
        $region35: #{tpu_custom_call.1} parent=31 // pred_region
          %192 = dma.done %s184, 32
        $region36: #{tpu_custom_call.1} parent=31 // pred_fallthru
          _
        // Predicated region
        $region37: #{tpu_custom_call.1} parent=31 // pred_check
          %p193 = pneg %p63
        $region38: #{tpu_custom_call.1} parent=31 // pred_check_branch
          %195 = sbr.rel (%p193) target = $region40
        $region39: #{tpu_custom_call.1} parent=31 // pred_region
          %197 = dma.done [#allocation6], 18432
        $region40: #{tpu_custom_call.1} parent=31 // pred_fallthru
          _
        // Predicated region
        $region41: #{tpu_custom_call.1} parent=31 // pred_check
          %p198 = pneg %p84
        $region42: #{tpu_custom_call.1} parent=31 // pred_check_branch
          %200 = sbr.rel (%p198) target = $region44
        $region43: #{tpu_custom_call.1} parent=31 // pred_region
          %202 = dma.done [#allocation6], 32
        $region44: #{tpu_custom_call.1} parent=31 // pred_fallthru
          _
        %s203 = sand.u32 %s29, 1
        %s204 = scalar_lea.sflag [#allocation3], %s203
        %s205 = sand.u32 %s29, 1
        %s206 = smul.addr %s205, 2
        %s207 = scalar_lea.vmem [#allocation2], %s206
        %p208 = pneg %p42
        %p209 = pneg %p39
        %p210 = pneg %p63
        %p211 = pneg %p60
        %p212 = pneg %p84
        %p213 = pneg %p81
        %p214 = pneg %p110
        %p215 = pneg %p107
        %s216 = sand.u32 %s97, 1
        %s217 = scalar_lea.sflag [#allocation4], %s216
        %s218 = sand.u32 %s97, 1
        %s219 = smul.addr %s218, 4
        %s220 = scalar_lea.vmem [#allocation8], %s219
        %v221 = vld [vmem:[%s187] sm:$0x1]
        %v222 = vld [vmem:[%s187 + $0x1] sm:$0x1]
        %224 = vst [vmem:[#allocation1] ss:$9 sm:$0xff] %v222
        %v225 = vld [vmem:[#allocation1] sm:$0xff]
        %227 = vst [vmem:[#allocation1] ss:$9 sm:$0xff] %v221
        %v228 = vld [vmem:[#allocation1] sm:$0xff]
        %229 = vst [vmem:[#allocation1] ss:$9 sm:$0xff] %v222
        %v230 = vld [vmem:[#allocation1] sm:$0xff]
        %231 = vst [vmem:[#allocation1] ss:$9 sm:$0xff] %v221
        %v232 = vld [vmem:[#allocation1] sm:$0xff]
        %v233 = vshrl.u32 %v225, 16
        %v235 = vshrl.u32 %v228, 16
        %v237 = vshrl.u32 %v230, 16
        %v239 = vshrl.u32 %v232, 16
        %245 = vst [vmem:[#allocation1] ss:$9 sm:$0xff] %v222
        %v246 = vld [vmem:[#allocation1] sm:$0xff]
        %247 = vst [vmem:[#allocation1] ss:$9 sm:$0xff] %v221
        %v248 = vld [vmem:[#allocation1] sm:$0xff]
        %249 = vst [vmem:[#allocation1] ss:$9 sm:$0xff] %v222
        %v250 = vld [vmem:[#allocation1] sm:$0xff]
        %251 = vst [vmem:[#allocation1] ss:$9 sm:$0xff] %v221
        %v252 = vld [vmem:[#allocation1] sm:$0xff]
        %v253 = vshrl.u32 %v246, 16
        %v255 = vrot.slane %v253, 7
        %v256 = vshll.u32 %v246, 16
        %v258 = vor.u32 %v255, %v256
        %v259 = vshrl.u32 %v248, 16
        %v261 = vrot.slane %v259, 7
        %v262 = vshll.u32 %v248, 16
        %v264 = vor.u32 %v261, %v262
        %v265 = vshrl.u32 %v250, 16
        %v267 = vrot.slane %v265, 7
        %v268 = vshll.u32 %v250, 16
        %v270 = vor.u32 %v267, %v268
        %v271 = vshrl.u32 %v252, 16
        %v273 = vrot.slane %v271, 7
        %v274 = vshll.u32 %v252, 16
        %v276 = vor.u32 %v273, %v274
        %281 = vst [vmem:[#allocation1] ss:$9 sm:$0xff] %v222
        %v282 = vld [vmem:[#allocation1] sm:$0xff]
        %283 = vst [vmem:[#allocation1] ss:$9 sm:$0xff] %v221
        %v284 = vld [vmem:[#allocation1] sm:$0xff]
        %285 = vst [vmem:[#allocation1] ss:$9 sm:$0xff] %v222
        %v286 = vld [vmem:[#allocation1] sm:$0xff]
        %287 = vst [vmem:[#allocation1] ss:$9 sm:$0xff] %v221
        %v288 = vld [vmem:[#allocation1] sm:$0xff]
        %v289 = vshll.u32 %v282, 16
        %v291 = vrot.slane %v289, 7
        %v292 = vshll.u32 %v284, 16
        %v294 = vrot.slane %v292, 7
        %v295 = vshll.u32 %v286, 16
        %v297 = vrot.slane %v295, 7
        %v298 = vshll.u32 %v288, 16
        %v300 = vrot.slane %v298, 7
        %vm305 = vcmask 1040384
        %vm306 = vsmask.f32 256
        %vm307 = vmand %vm305, %vm306
        %v308 = vsel %vm307, %v233, %v258
        %v309 = vsel %vm307, %v235, %v264
        %v310 = vsel %vm307, %v237, %v270
        %v311 = vsel %vm307, %v239, %v276
        %vm312 = vcmask 1041408
        %vm313 = vsmask.f32 1280
        %vm314 = vmand %vm312, %vm313
        %v315 = vsel %vm314, %v308, %v291
        %v316 = vsel %vm314, %v309, %v294
        %v317 = vsel %vm314, %v310, %v297
        %v318 = vsel %vm314, %v311, %v300
        %v320 = vshrl.u32 %v315, 16
        %v322 = vshll.u32 %v315, 16
        %v324 = vrot.slane %v322, 1
        %v325 = vor.u32 %v320, %v324
        %v327 = vshrl.u32 %v316, 16
        %v329 = vshll.u32 %v316, 16
        %v331 = vrot.slane %v329, 1
        %v332 = vor.u32 %v327, %v331
        %v335 = vrot.slane %v315, 1
        %v336 = vrot.slane %v316, 1
        %v338 = vshrl.u32 %v317, 16
        %v340 = vshll.u32 %v317, 16
        %v342 = vrot.slane %v340, 1
        %v343 = vor.u32 %v338, %v342
        %v345 = vrot.slane %v317, 1
        %v347 = vshrl.u32 %v318, 16
        %v349 = vshll.u32 %v318, 16
        %v351 = vrot.slane %v349, 1
        %v352 = vor.u32 %v347, %v351
        %v354 = vrot.slane %v318, 1
        %v355 = vrot.slane %v325, 7
        %v356 = vrot.slane %v335, 6
        %v357 = vrot.slane %v316, 5
        %v358 = vrot.slane %v332, 4
        %v359 = vrot.slane %v336, 3
        %v360 = vrot.slane %v317, 2
        %v361 = vrot.slane %v343, 1
        %v362 = vrot.slane %v332, 7
        %v363 = vrot.slane %v336, 6
        %v364 = vrot.slane %v317, 5
        %v365 = vrot.slane %v343, 4
        %v366 = vrot.slane %v345, 3
        %v367 = vrot.slane %v318, 2
        %v368 = vrot.slane %v352, 1
        %vm369 = vcmask 1040384
        %v371 = vsel %vm369, %v315, %v355
        %vm372 = vcmask 1042434
        %v375 = vsel %vm372, %v356, %v357
        %vm376 = vcmask 1041408
        %v377 = vsel %vm376, %v371, %v375
        %vm378 = vcmask 1044484
        %v381 = vsel %vm378, %v358, %v359
        %vm382 = vcmask 1046534
        %v385 = vsel %vm382, %v360, %v361
        %vm386 = vcmask 1045508
        %v387 = vsel %vm386, %v381, %v385
        %vm388 = vcmask 1043456
        %v389 = vsel %vm388, %v377, %v387
        %v391 = vsel %vm369, %v316, %v362
        %v394 = vsel %vm372, %v363, %v364
        %v395 = vsel %vm376, %v391, %v394
        %v398 = vsel %vm378, %v365, %v366
        %v401 = vsel %vm382, %v367, %v368
        %v402 = vsel %vm386, %v398, %v401
        %v403 = vsel %vm388, %v395, %v402
        %v404 = vld [vmem:[#allocation5] sm:$0xff]
        %v405 = vld [vmem:[#allocation5 + $0x8] sm:$0xff]
        %v406 = vld [vmem:[#allocation5 + $0x10] sm:$0xff]
        %v407 = vld [vmem:[#allocation5 + $0x18] sm:$0xff]
        %v408 = vld [vmem:[#allocation5 + $0x20] sm:$0xff]
        %v409 = vld [vmem:[#allocation5 + $0x28] sm:$0xff]
        %v410 = vld [vmem:[#allocation5 + $0x30] sm:$0xff]
        %v411 = vld [vmem:[#allocation5 + $0x38] sm:$0xff]
        %v412 = vld [vmem:[#allocation5 + $0x40] sm:$0xff]
        %v413 = vld [vmem:[#allocation5 + $0x48] sm:$0xff]
        %v414 = vld [vmem:[#allocation5 + $0x50] sm:$0xff]
        %v415 = vld [vmem:[#allocation5 + $0x58] sm:$0xff]
        %v416 = vld [vmem:[#allocation5 + $0x60] sm:$0xff]
        %v417 = vld [vmem:[#allocation5 + $0x68] sm:$0xff]
        %v418 = vld [vmem:[#allocation5 + $0x70] sm:$0xff]
        %v419 = vld [vmem:[#allocation5 + $0x78] sm:$0xff]
        %v420 = vld [vmem:[#allocation5 + $0x80] sm:$0xff]
        %v421 = vld [vmem:[#allocation5 + $0x88] sm:$0xff]
        %v422 = vld [vmem:[#allocation5 + $0x90] sm:$0xff]
        %v423 = vld [vmem:[#allocation5 + $0x98] sm:$0xff]
        %v424 = vld [vmem:[#allocation5 + $0xa0] sm:$0xff]
        %v425 = vld [vmem:[#allocation5 + $0xa8] sm:$0xff]
        %v426 = vld [vmem:[#allocation5 + $0xb0] sm:$0xff]
        %v427 = vld [vmem:[#allocation5 + $0xb8] sm:$0xff]
        %v428 = vld [vmem:[#allocation5 + $0xc0] sm:$0xff]
        %v429 = vld [vmem:[#allocation5 + $0xc8] sm:$0xff]
        %v430 = vld [vmem:[#allocation5 + $0xd0] sm:$0xff]
        %v431 = vld [vmem:[#allocation5 + $0xd8] sm:$0xff]
        %v432 = vld [vmem:[#allocation5 + $0xe0] sm:$0xff]
        %v433 = vld [vmem:[#allocation5 + $0xe8] sm:$0xff]
        %v434 = vld [vmem:[#allocation5 + $0xf0] sm:$0xff]
        %v435 = vld [vmem:[#allocation5 + $0xf8] sm:$0xff]
        %v436 = vld [vmem:[#allocation5 + $0x100] sm:$0xff]
        %v437 = vld [vmem:[#allocation5 + $0x108] sm:$0xff]
        %v438 = vld [vmem:[#allocation5 + $0x110] sm:$0xff]
        %v439 = vld [vmem:[#allocation5 + $0x118] sm:$0xff]
        %v440 = vld [vmem:[#allocation5 + $0x120] sm:$0xff]
        %v441 = vld [vmem:[#allocation5 + $0x128] sm:$0xff]
        %v442 = vld [vmem:[#allocation5 + $0x130] sm:$0xff]
        %v443 = vld [vmem:[#allocation5 + $0x138] sm:$0xff]
        %v444 = vld [vmem:[#allocation5 + $0x140] sm:$0xff]
        %v445 = vld [vmem:[#allocation5 + $0x148] sm:$0xff]
        %v446 = vld [vmem:[#allocation5 + $0x150] sm:$0xff]
        %v447 = vld [vmem:[#allocation5 + $0x158] sm:$0xff]
        %v448 = vld [vmem:[#allocation5 + $0x160] sm:$0xff]
        %v449 = vld [vmem:[#allocation5 + $0x168] sm:$0xff]
        %v450 = vld [vmem:[#allocation5 + $0x170] sm:$0xff]
        %v451 = vld [vmem:[#allocation5 + $0x178] sm:$0xff]
        %v452 = vld [vmem:[#allocation5 + $0x180] sm:$0xff]
        %v453 = vld [vmem:[#allocation5 + $0x188] sm:$0xff]
        %v454 = vld [vmem:[#allocation5 + $0x190] sm:$0xff]
        %v455 = vld [vmem:[#allocation5 + $0x198] sm:$0xff]
        %v456 = vld [vmem:[#allocation5 + $0x1a0] sm:$0xff]
        %v457 = vld [vmem:[#allocation5 + $0x1a8] sm:$0xff]
        %v458 = vld [vmem:[#allocation5 + $0x1b0] sm:$0xff]
        %v459 = vld [vmem:[#allocation5 + $0x1b8] sm:$0xff]
        %v460 = vld [vmem:[#allocation5 + $0x1c0] sm:$0xff]
        %v461 = vld [vmem:[#allocation5 + $0x1c8] sm:$0xff]
        %v462 = vld [vmem:[#allocation5 + $0x1d0] sm:$0xff]
        %v463 = vld [vmem:[#allocation5 + $0x1d8] sm:$0xff]
        %v464 = vld [vmem:[#allocation5 + $0x1e0] sm:$0xff]
        %v465 = vld [vmem:[#allocation5 + $0x1e8] sm:$0xff]
        %v466 = vld [vmem:[#allocation5 + $0x1f0] sm:$0xff]
        %v467 = vld [vmem:[#allocation5 + $0x1f8] sm:$0xff]
        %v468 = vld [vmem:[#allocation5 + $0x200] sm:$0xff]
        %v469 = vld [vmem:[#allocation5 + $0x208] sm:$0xff]
        %v470 = vld [vmem:[#allocation5 + $0x210] sm:$0xff]
        %v471 = vld [vmem:[#allocation5 + $0x218] sm:$0xff]
        %v472 = vld [vmem:[#allocation5 + $0x220] sm:$0xff]
        %v473 = vld [vmem:[#allocation5 + $0x228] sm:$0xff]
        %v474 = vld [vmem:[#allocation5 + $0x230] sm:$0xff]
        %v475 = vld [vmem:[#allocation5 + $0x238] sm:$0xff]
        %v476 = vld [vmem:[#allocation5 + $0x240] sm:$0xff]
        %v477 = vld [vmem:[#allocation5 + $0x248] sm:$0xff]
        %v478 = vld [vmem:[#allocation5 + $0x250] sm:$0xff]
        %v479 = vld [vmem:[#allocation5 + $0x258] sm:$0xff]
        %v480 = vld [vmem:[#allocation5 + $0x260] sm:$0xff]
        %v481 = vld [vmem:[#allocation5 + $0x268] sm:$0xff]
        %v482 = vld [vmem:[#allocation5 + $0x270] sm:$0xff]
        %v483 = vld [vmem:[#allocation5 + $0x278] sm:$0xff]
        %v484 = vld [vmem:[#allocation5 + $0x280] sm:$0xff]
        %v485 = vld [vmem:[#allocation5 + $0x288] sm:$0xff]
        %v486 = vld [vmem:[#allocation5 + $0x290] sm:$0xff]
        %v487 = vld [vmem:[#allocation5 + $0x298] sm:$0xff]
        %v488 = vld [vmem:[#allocation5 + $0x2a0] sm:$0xff]
        %v489 = vld [vmem:[#allocation5 + $0x2a8] sm:$0xff]
        %v490 = vld [vmem:[#allocation5 + $0x2b0] sm:$0xff]
        %v491 = vld [vmem:[#allocation5 + $0x2b8] sm:$0xff]
        %v492 = vld [vmem:[#allocation5 + $0x2c0] sm:$0xff]
        %v493 = vld [vmem:[#allocation5 + $0x2c8] sm:$0xff]
        %v494 = vld [vmem:[#allocation5 + $0x2d0] sm:$0xff]
        %v495 = vld [vmem:[#allocation5 + $0x2d8] sm:$0xff]
        %v496 = vld [vmem:[#allocation5 + $0x2e0] sm:$0xff]
        %v497 = vld [vmem:[#allocation5 + $0x2e8] sm:$0xff]
        %v498 = vld [vmem:[#allocation5 + $0x2f0] sm:$0xff]
        %v499 = vld [vmem:[#allocation5 + $0x2f8] sm:$0xff]
        %v500 = vld [vmem:[#allocation5 + $0x300] sm:$0xff]
        %v501 = vld [vmem:[#allocation5 + $0x308] sm:$0xff]
        %v502 = vld [vmem:[#allocation5 + $0x310] sm:$0xff]
        %v503 = vld [vmem:[#allocation5 + $0x318] sm:$0xff]
        %v504 = vld [vmem:[#allocation5 + $0x320] sm:$0xff]
        %v505 = vld [vmem:[#allocation5 + $0x328] sm:$0xff]
        %v506 = vld [vmem:[#allocation5 + $0x330] sm:$0xff]
        %v507 = vld [vmem:[#allocation5 + $0x338] sm:$0xff]
        %v508 = vld [vmem:[#allocation5 + $0x340] sm:$0xff]
        %v509 = vld [vmem:[#allocation5 + $0x348] sm:$0xff]
        %v510 = vld [vmem:[#allocation5 + $0x350] sm:$0xff]
        %v511 = vld [vmem:[#allocation5 + $0x358] sm:$0xff]
        %v512 = vld [vmem:[#allocation5 + $0x360] sm:$0xff]
        %v513 = vld [vmem:[#allocation5 + $0x368] sm:$0xff]
        %v514 = vld [vmem:[#allocation5 + $0x370] sm:$0xff]
        %v515 = vld [vmem:[#allocation5 + $0x378] sm:$0xff]
        %v516 = vld [vmem:[#allocation5 + $0x380] sm:$0xff]
        %v517 = vld [vmem:[#allocation5 + $0x388] sm:$0xff]
        %v518 = vld [vmem:[#allocation5 + $0x390] sm:$0xff]
        %v519 = vld [vmem:[#allocation5 + $0x398] sm:$0xff]
        %v520 = vld [vmem:[#allocation5 + $0x3a0] sm:$0xff]
        %v521 = vld [vmem:[#allocation5 + $0x3a8] sm:$0xff]
        %v522 = vld [vmem:[#allocation5 + $0x3b0] sm:$0xff]
        %v523 = vld [vmem:[#allocation5 + $0x3b8] sm:$0xff]
        %v524 = vld [vmem:[#allocation5 + $0x3c0] sm:$0xff]
        %v525 = vld [vmem:[#allocation5 + $0x3c8] sm:$0xff]
        %v526 = vld [vmem:[#allocation5 + $0x3d0] sm:$0xff]
        %v527 = vld [vmem:[#allocation5 + $0x3d8] sm:$0xff]
        %v528 = vld [vmem:[#allocation5 + $0x3e0] sm:$0xff]
        %v529 = vld [vmem:[#allocation5 + $0x3e8] sm:$0xff]
        %v530 = vld [vmem:[#allocation5 + $0x3f0] sm:$0xff]
        %v531 = vld [vmem:[#allocation5 + $0x3f8] sm:$0xff]
        %v532 = vld [vmem:[#allocation5 + $0x400] sm:$0xff]
        %v533 = vld [vmem:[#allocation5 + $0x408] sm:$0xff]
        %v534 = vld [vmem:[#allocation5 + $0x410] sm:$0xff]
        %v535 = vld [vmem:[#allocation5 + $0x418] sm:$0xff]
        %v536 = vld [vmem:[#allocation5 + $0x420] sm:$0xff]
        %v537 = vld [vmem:[#allocation5 + $0x428] sm:$0xff]
        %v538 = vld [vmem:[#allocation5 + $0x430] sm:$0xff]
        %v539 = vld [vmem:[#allocation5 + $0x438] sm:$0xff]
        %v540 = vld [vmem:[#allocation5 + $0x440] sm:$0xff]
        %v541 = vld [vmem:[#allocation5 + $0x448] sm:$0xff]
        %v542 = vld [vmem:[#allocation5 + $0x450] sm:$0xff]
        %v543 = vld [vmem:[#allocation5 + $0x458] sm:$0xff]
        %v544 = vld [vmem:[#allocation5 + $0x460] sm:$0xff]
        %v545 = vld [vmem:[#allocation5 + $0x468] sm:$0xff]
        %v546 = vld [vmem:[#allocation5 + $0x470] sm:$0xff]
        %v547 = vld [vmem:[#allocation5 + $0x478] sm:$0xff]
        %v548 = vld [vmem:[#allocation7] sm:$0x3]
        %v550 = vperm.slane %v548, 0
        %v551 = vperm.slane %v548, 1
        %554 = vst [vmem:[#allocation1] ss:$9 sm:$0xff] %v389
        %s555 = scalar_lea.vmem [#allocation1], 1
        %556 = vst [vmem:[%s555] ss:$9 sm:$0xff] %v403
        %v557 = vld [vmem:[#allocation1] sm:$0xff]
        %v558 = vld [vmem:[#allocation1 + $0x9] sm:$0xff]
        %v559 = vld [vmem:[#allocation1 + $0x12] sm:$0xff]
        %v560 = vld [vmem:[#allocation1 + $0x1b] sm:$0xff]
        %v561 = vld [vmem:[#allocation1 + $0x24] sm:$0xff]
        %v562 = vld [vmem:[#allocation1 + $0x2d] sm:$0xff]
        %v563 = vld [vmem:[#allocation1 + $0x36] sm:$0xff]
        %v564 = vld [vmem:[#allocation1 + $0x3f] sm:$0xff]
        %566 = vst [vmem:[#allocation1] ss:$9 sm:$0xff] %v345
        %568 = vst [vmem:[%s555] ss:$9 sm:$0xff] %v354
        %v569 = vld [vmem:[#allocation1] sm:$0xff]
        %v723 = vunpack.c.l.b16 %v404
        %v724 = vunpack.c.h.b16 %v404
        %v725 = vunpack.c.l.b16 %v405
        %v726 = vunpack.c.h.b16 %v405
        %v727 = vunpack.c.l.b16 %v406
        %v728 = vunpack.c.h.b16 %v406
        %v729 = vunpack.c.l.b16 %v407
        %v730 = vunpack.c.h.b16 %v407
        %v731 = vunpack.c.l.b16 %v408
        %v732 = vunpack.c.h.b16 %v408
        %v733 = vunpack.c.l.b16 %v409
        %v734 = vunpack.c.h.b16 %v409
        %v735 = vunpack.c.l.b16 %v410
        %v736 = vunpack.c.h.b16 %v410
        %v737 = vunpack.c.l.b16 %v411
        %v738 = vunpack.c.h.b16 %v411
        %v739 = vunpack.c.l.b16 %v412
        %v740 = vunpack.c.h.b16 %v412
        %v741 = vunpack.c.l.b16 %v413
        %v742 = vunpack.c.h.b16 %v413
        %v743 = vunpack.c.l.b16 %v414
        %v744 = vunpack.c.h.b16 %v414
        %v745 = vunpack.c.l.b16 %v415
        %v746 = vunpack.c.h.b16 %v415
        %v747 = vunpack.c.l.b16 %v416
        %v748 = vunpack.c.h.b16 %v416
        %v749 = vunpack.c.l.b16 %v417
        %v750 = vunpack.c.h.b16 %v417
        %v751 = vunpack.c.l.b16 %v418
        %v752 = vunpack.c.h.b16 %v418
        %v753 = vunpack.c.l.b16 %v419
        %v754 = vunpack.c.h.b16 %v419
        %v755 = vunpack.c.l.b16 %v420
        %v756 = vunpack.c.h.b16 %v420
        %v757 = vunpack.c.l.b16 %v421
        %v758 = vunpack.c.h.b16 %v421
        %v759 = vunpack.c.l.b16 %v422
        %v760 = vunpack.c.h.b16 %v422
        %v761 = vunpack.c.l.b16 %v423
        %v762 = vunpack.c.h.b16 %v423
        %v763 = vunpack.c.l.b16 %v424
        %v764 = vunpack.c.h.b16 %v424
        %v765 = vunpack.c.l.b16 %v425
        %v766 = vunpack.c.h.b16 %v425
        %v767 = vunpack.c.l.b16 %v426
        %v768 = vunpack.c.h.b16 %v426
        %v769 = vunpack.c.l.b16 %v427
        %v770 = vunpack.c.h.b16 %v427
        %v771 = vunpack.c.l.b16 %v428
        %v772 = vunpack.c.h.b16 %v428
        %v773 = vunpack.c.l.b16 %v429
        %v774 = vunpack.c.h.b16 %v429
        %v775 = vunpack.c.l.b16 %v430
        %v776 = vunpack.c.h.b16 %v430
        %v777 = vunpack.c.l.b16 %v431
        %v778 = vunpack.c.h.b16 %v431
        %v779 = vunpack.c.l.b16 %v432
        %v780 = vunpack.c.h.b16 %v432
        %v781 = vunpack.c.l.b16 %v433
        %v782 = vunpack.c.h.b16 %v433
        %v783 = vunpack.c.l.b16 %v434
        %v784 = vunpack.c.h.b16 %v434
        %v785 = vunpack.c.l.b16 %v435
        %v786 = vunpack.c.h.b16 %v435
        %v787 = vunpack.c.l.b16 %v436
        %v788 = vunpack.c.h.b16 %v436
        %v789 = vunpack.c.l.b16 %v437
        %v790 = vunpack.c.h.b16 %v437
        %v791 = vunpack.c.l.b16 %v438
        %v792 = vunpack.c.h.b16 %v438
        %v793 = vunpack.c.l.b16 %v439
        %v794 = vunpack.c.h.b16 %v439
        %v795 = vunpack.c.l.b16 %v440
        %v796 = vunpack.c.h.b16 %v440
        %v797 = vunpack.c.l.b16 %v441
        %v798 = vunpack.c.h.b16 %v441
        %v799 = vunpack.c.l.b16 %v442
        %v800 = vunpack.c.h.b16 %v442
        %v801 = vunpack.c.l.b16 %v443
        %v802 = vunpack.c.h.b16 %v443
        %v803 = vunpack.c.l.b16 %v444
        %v804 = vunpack.c.h.b16 %v444
        %v805 = vunpack.c.l.b16 %v445
        %v806 = vunpack.c.h.b16 %v445
        %v807 = vunpack.c.l.b16 %v446
        %v808 = vunpack.c.h.b16 %v446
        %v809 = vunpack.c.l.b16 %v447
        %v810 = vunpack.c.h.b16 %v447
        %v811 = vunpack.c.l.b16 %v448
        %v812 = vunpack.c.h.b16 %v448
        %v813 = vunpack.c.l.b16 %v449
        %v814 = vunpack.c.h.b16 %v449
        %v815 = vunpack.c.l.b16 %v450
        %v816 = vunpack.c.h.b16 %v450
        %v817 = vunpack.c.l.b16 %v451
        %v818 = vunpack.c.h.b16 %v451
        %v819 = vunpack.c.l.b16 %v452
        %v820 = vunpack.c.h.b16 %v452
        %v821 = vunpack.c.l.b16 %v453
        %v822 = vunpack.c.h.b16 %v453
        %v823 = vunpack.c.l.b16 %v454
        %v824 = vunpack.c.h.b16 %v454
        %v825 = vunpack.c.l.b16 %v455
        %v826 = vunpack.c.h.b16 %v455
        %v827 = vunpack.c.l.b16 %v456
        %v828 = vunpack.c.h.b16 %v456
        %v829 = vunpack.c.l.b16 %v457
        %v830 = vunpack.c.h.b16 %v457
        %v831 = vunpack.c.l.b16 %v458
        %v832 = vunpack.c.h.b16 %v458
        %v833 = vunpack.c.l.b16 %v459
        %v834 = vunpack.c.h.b16 %v459
        %v835 = vunpack.c.l.b16 %v460
        %v836 = vunpack.c.h.b16 %v460
        %v837 = vunpack.c.l.b16 %v461
        %v838 = vunpack.c.h.b16 %v461
        %v839 = vunpack.c.l.b16 %v462
        %v840 = vunpack.c.h.b16 %v462
        %v841 = vunpack.c.l.b16 %v463
        %v842 = vunpack.c.h.b16 %v463
        %v843 = vunpack.c.l.b16 %v464
        %v844 = vunpack.c.h.b16 %v464
        %v845 = vunpack.c.l.b16 %v465
        %v846 = vunpack.c.h.b16 %v465
        %v847 = vunpack.c.l.b16 %v466
        %v848 = vunpack.c.h.b16 %v466
        %v849 = vunpack.c.l.b16 %v467
        %v850 = vunpack.c.h.b16 %v467
        %v851 = vunpack.c.l.b16 %v468
        %v852 = vunpack.c.h.b16 %v468
        %v853 = vunpack.c.l.b16 %v469
        %v854 = vunpack.c.h.b16 %v469
        %v855 = vunpack.c.l.b16 %v470
        %v856 = vunpack.c.h.b16 %v470
        %v857 = vunpack.c.l.b16 %v471
        %v858 = vunpack.c.h.b16 %v471
        %v859 = vunpack.c.l.b16 %v472
        %v860 = vunpack.c.h.b16 %v472
        %v861 = vunpack.c.l.b16 %v473
        %v862 = vunpack.c.h.b16 %v473
        %v863 = vunpack.c.l.b16 %v474
        %v864 = vunpack.c.h.b16 %v474
        %v865 = vunpack.c.l.b16 %v475
        %v866 = vunpack.c.h.b16 %v475
        %v867 = vunpack.c.l.b16 %v476
        %v868 = vunpack.c.h.b16 %v476
        %v869 = vunpack.c.l.b16 %v477
        %v870 = vunpack.c.h.b16 %v477
        %v871 = vunpack.c.l.b16 %v478
        %v872 = vunpack.c.h.b16 %v478
        %v873 = vunpack.c.l.b16 %v479
        %v874 = vunpack.c.h.b16 %v479
        %v875 = vunpack.c.l.b16 %v480
        %v876 = vunpack.c.h.b16 %v480
        %v877 = vunpack.c.l.b16 %v481
        %v878 = vunpack.c.h.b16 %v481
        %v879 = vunpack.c.l.b16 %v482
        %v880 = vunpack.c.h.b16 %v482
        %v881 = vunpack.c.l.b16 %v483
        %v882 = vunpack.c.h.b16 %v483
        %v883 = vunpack.c.l.b16 %v484
        %v884 = vunpack.c.h.b16 %v484
        %v885 = vunpack.c.l.b16 %v485
        %v886 = vunpack.c.h.b16 %v485
        %v887 = vunpack.c.l.b16 %v486
        %v888 = vunpack.c.h.b16 %v486
        %v889 = vunpack.c.l.b16 %v487
        %v890 = vunpack.c.h.b16 %v487
        %v891 = vunpack.c.l.b16 %v488
        %v892 = vunpack.c.h.b16 %v488
        %v893 = vunpack.c.l.b16 %v489
        %v894 = vunpack.c.h.b16 %v489
        %v895 = vunpack.c.l.b16 %v490
        %v896 = vunpack.c.h.b16 %v490
        %v897 = vunpack.c.l.b16 %v491
        %v898 = vunpack.c.h.b16 %v491
        %v899 = vunpack.c.l.b16 %v492
        %v900 = vunpack.c.h.b16 %v492
        %v901 = vunpack.c.l.b16 %v493
        %v902 = vunpack.c.h.b16 %v493
        %v903 = vunpack.c.l.b16 %v494
        %v904 = vunpack.c.h.b16 %v494
        %v905 = vunpack.c.l.b16 %v495
        %v906 = vunpack.c.h.b16 %v495
        %v907 = vunpack.c.l.b16 %v496
        %v908 = vunpack.c.h.b16 %v496
        %v909 = vunpack.c.l.b16 %v497
        %v910 = vunpack.c.h.b16 %v497
        %v911 = vunpack.c.l.b16 %v498
        %v912 = vunpack.c.h.b16 %v498
        %v913 = vunpack.c.l.b16 %v499
        %v914 = vunpack.c.h.b16 %v499
        %v915 = vunpack.c.l.b16 %v500
        %v916 = vunpack.c.h.b16 %v500
        %v917 = vunpack.c.l.b16 %v501
        %v918 = vunpack.c.h.b16 %v501
        %v919 = vunpack.c.l.b16 %v502
        %v920 = vunpack.c.h.b16 %v502
        %v921 = vunpack.c.l.b16 %v503
        %v922 = vunpack.c.h.b16 %v503
        %v923 = vunpack.c.l.b16 %v504
        %v924 = vunpack.c.h.b16 %v504
        %v925 = vunpack.c.l.b16 %v505
        %v926 = vunpack.c.h.b16 %v505
        %v927 = vunpack.c.l.b16 %v506
        %v928 = vunpack.c.h.b16 %v506
        %v929 = vunpack.c.l.b16 %v507
        %v930 = vunpack.c.h.b16 %v507
        %v931 = vunpack.c.l.b16 %v508
        %v932 = vunpack.c.h.b16 %v508
        %v933 = vunpack.c.l.b16 %v509
        %v934 = vunpack.c.h.b16 %v509
        %v935 = vunpack.c.l.b16 %v510
        %v936 = vunpack.c.h.b16 %v510
        %v937 = vunpack.c.l.b16 %v511
        %v938 = vunpack.c.h.b16 %v511
        %v939 = vunpack.c.l.b16 %v512
        %v940 = vunpack.c.h.b16 %v512
        %v941 = vunpack.c.l.b16 %v513
        %v942 = vunpack.c.h.b16 %v513
        %v943 = vunpack.c.l.b16 %v514
        %v944 = vunpack.c.h.b16 %v514
        %v945 = vunpack.c.l.b16 %v515
        %v946 = vunpack.c.h.b16 %v515
        %v947 = vunpack.c.l.b16 %v516
        %v948 = vunpack.c.h.b16 %v516
        %v949 = vunpack.c.l.b16 %v517
        %v950 = vunpack.c.h.b16 %v517
        %v951 = vunpack.c.l.b16 %v518
        %v952 = vunpack.c.h.b16 %v518
        %v953 = vunpack.c.l.b16 %v519
        %v954 = vunpack.c.h.b16 %v519
        %v955 = vunpack.c.l.b16 %v520
        %v956 = vunpack.c.h.b16 %v520
        %v957 = vunpack.c.l.b16 %v521
        %v958 = vunpack.c.h.b16 %v521
        %v959 = vunpack.c.l.b16 %v522
        %v960 = vunpack.c.h.b16 %v522
        %v961 = vunpack.c.l.b16 %v523
        %v962 = vunpack.c.h.b16 %v523
        %v963 = vunpack.c.l.b16 %v524
        %v964 = vunpack.c.h.b16 %v524
        %v965 = vunpack.c.l.b16 %v525
        %v966 = vunpack.c.h.b16 %v525
        %v967 = vunpack.c.l.b16 %v526
        %v968 = vunpack.c.h.b16 %v526
        %v969 = vunpack.c.l.b16 %v527
        %v970 = vunpack.c.h.b16 %v527
        %v971 = vunpack.c.l.b16 %v528
        %v972 = vunpack.c.h.b16 %v528
        %v973 = vunpack.c.l.b16 %v529
        %v974 = vunpack.c.h.b16 %v529
        %v975 = vunpack.c.l.b16 %v530
        %v976 = vunpack.c.h.b16 %v530
        %v977 = vunpack.c.l.b16 %v531
        %v978 = vunpack.c.h.b16 %v531
        %v979 = vunpack.c.l.b16 %v532
        %v980 = vunpack.c.h.b16 %v532
        %v981 = vunpack.c.l.b16 %v533
        %v982 = vunpack.c.h.b16 %v533
        %v983 = vunpack.c.l.b16 %v534
        %v984 = vunpack.c.h.b16 %v534
        %v985 = vunpack.c.l.b16 %v535
        %v986 = vunpack.c.h.b16 %v535
        %v987 = vunpack.c.l.b16 %v536
        %v988 = vunpack.c.h.b16 %v536
        %v989 = vunpack.c.l.b16 %v537
        %v990 = vunpack.c.h.b16 %v537
        %v991 = vunpack.c.l.b16 %v538
        %v992 = vunpack.c.h.b16 %v538
        %v993 = vunpack.c.l.b16 %v539
        %v994 = vunpack.c.h.b16 %v539
        %v995 = vunpack.c.l.b16 %v540
        %v996 = vunpack.c.h.b16 %v540
        %v997 = vunpack.c.l.b16 %v541
        %v998 = vunpack.c.h.b16 %v541
        %v999 = vunpack.c.l.b16 %v542
        %v1000 = vunpack.c.h.b16 %v542
        %v1001 = vunpack.c.l.b16 %v543
        %v1002 = vunpack.c.h.b16 %v543
        %v1003 = vunpack.c.l.b16 %v544
        %v1004 = vunpack.c.h.b16 %v544
        %v1005 = vunpack.c.l.b16 %v545
        %v1006 = vunpack.c.h.b16 %v545
        %v1007 = vunpack.c.l.b16 %v546
        %v1008 = vunpack.c.h.b16 %v546
        %v1009 = vunpack.c.l.b16 %v547
        %v1010 = vunpack.c.h.b16 %v547
        %v1011 = vpack.c.b16 %v725, %v723
        %v1012 = vpack.c.b16 %v726, %v724
        %v1013 = vpack.c.b16 %v729, %v727
        %v1014 = vpack.c.b16 %v730, %v728
        %v1015 = vpack.c.b16 %v733, %v731
        %v1016 = vpack.c.b16 %v734, %v732
        %v1017 = vpack.c.b16 %v737, %v735
        %v1018 = vpack.c.b16 %v738, %v736
        %v1019 = vpack.c.b16 %v741, %v739
        %v1020 = vpack.c.b16 %v742, %v740
        %v1021 = vpack.c.b16 %v745, %v743
        %v1022 = vpack.c.b16 %v746, %v744
        %v1023 = vpack.c.b16 %v749, %v747
        %v1024 = vpack.c.b16 %v750, %v748
        %v1025 = vpack.c.b16 %v753, %v751
        %v1026 = vpack.c.b16 %v754, %v752
        %v1027 = vpack.c.b16 %v757, %v755
        %v1028 = vpack.c.b16 %v758, %v756
        %v1029 = vpack.c.b16 %v761, %v759
        %v1030 = vpack.c.b16 %v762, %v760
        %v1031 = vpack.c.b16 %v765, %v763
        %v1032 = vpack.c.b16 %v766, %v764
        %v1033 = vpack.c.b16 %v769, %v767
        %v1034 = vpack.c.b16 %v770, %v768
        %v1035 = vpack.c.b16 %v773, %v771
        %v1036 = vpack.c.b16 %v774, %v772
        %v1037 = vpack.c.b16 %v777, %v775
        %v1038 = vpack.c.b16 %v778, %v776
        %v1039 = vpack.c.b16 %v781, %v779
        %v1040 = vpack.c.b16 %v782, %v780
        %v1041 = vpack.c.b16 %v785, %v783
        %v1042 = vpack.c.b16 %v786, %v784
        %v1043 = vpack.c.b16 %v789, %v787
        %v1044 = vpack.c.b16 %v790, %v788
        %v1045 = vpack.c.b16 %v793, %v791
        %v1046 = vpack.c.b16 %v794, %v792
        %v1047 = vpack.c.b16 %v797, %v795
        %v1048 = vpack.c.b16 %v798, %v796
        %v1049 = vpack.c.b16 %v801, %v799
        %v1050 = vpack.c.b16 %v802, %v800
        %v1051 = vpack.c.b16 %v805, %v803
        %v1052 = vpack.c.b16 %v806, %v804
        %v1053 = vpack.c.b16 %v809, %v807
        %v1054 = vpack.c.b16 %v810, %v808
        %v1055 = vpack.c.b16 %v813, %v811
        %v1056 = vpack.c.b16 %v814, %v812
        %v1057 = vpack.c.b16 %v817, %v815
        %v1058 = vpack.c.b16 %v818, %v816
        %v1059 = vpack.c.b16 %v821, %v819
        %v1060 = vpack.c.b16 %v822, %v820
        %v1061 = vpack.c.b16 %v825, %v823
        %v1062 = vpack.c.b16 %v826, %v824
        %v1063 = vpack.c.b16 %v829, %v827
        %v1064 = vpack.c.b16 %v830, %v828
        %v1065 = vpack.c.b16 %v833, %v831
        %v1066 = vpack.c.b16 %v834, %v832
        %v1067 = vpack.c.b16 %v837, %v835
        %v1068 = vpack.c.b16 %v838, %v836
        %v1069 = vpack.c.b16 %v841, %v839
        %v1070 = vpack.c.b16 %v842, %v840
        %v1071 = vpack.c.b16 %v845, %v843
        %v1072 = vpack.c.b16 %v846, %v844
        %v1073 = vpack.c.b16 %v849, %v847
        %v1074 = vpack.c.b16 %v850, %v848
        %v1075 = vpack.c.b16 %v853, %v851
        %v1076 = vpack.c.b16 %v854, %v852
        %v1077 = vpack.c.b16 %v857, %v855
        %v1078 = vpack.c.b16 %v858, %v856
        %v1079 = vpack.c.b16 %v861, %v859
        %v1080 = vpack.c.b16 %v862, %v860
        %v1081 = vpack.c.b16 %v865, %v863
        %v1082 = vpack.c.b16 %v866, %v864
        %v1083 = vpack.c.b16 %v869, %v867
        %v1084 = vpack.c.b16 %v870, %v868
        %v1085 = vpack.c.b16 %v873, %v871
        %v1086 = vpack.c.b16 %v874, %v872
        %v1087 = vpack.c.b16 %v877, %v875
        %v1088 = vpack.c.b16 %v878, %v876
        %v1089 = vpack.c.b16 %v881, %v879
        %v1090 = vpack.c.b16 %v882, %v880
        %v1091 = vpack.c.b16 %v885, %v883
        %v1092 = vpack.c.b16 %v886, %v884
        %v1093 = vpack.c.b16 %v889, %v887
        %v1094 = vpack.c.b16 %v890, %v888
        %v1095 = vpack.c.b16 %v893, %v891
        %v1096 = vpack.c.b16 %v894, %v892
        %v1097 = vpack.c.b16 %v897, %v895
        %v1098 = vpack.c.b16 %v898, %v896
        %v1099 = vpack.c.b16 %v901, %v899
        %v1100 = vpack.c.b16 %v902, %v900
        %v1101 = vpack.c.b16 %v905, %v903
        %v1102 = vpack.c.b16 %v906, %v904
        %v1103 = vpack.c.b16 %v909, %v907
        %v1104 = vpack.c.b16 %v910, %v908
        %v1105 = vpack.c.b16 %v913, %v911
        %v1106 = vpack.c.b16 %v914, %v912
        %v1107 = vpack.c.b16 %v917, %v915
        %v1108 = vpack.c.b16 %v918, %v916
        %v1109 = vpack.c.b16 %v921, %v919
        %v1110 = vpack.c.b16 %v922, %v920
        %v1111 = vpack.c.b16 %v925, %v923
        %v1112 = vpack.c.b16 %v926, %v924
        %v1113 = vpack.c.b16 %v929, %v927
        %v1114 = vpack.c.b16 %v930, %v928
        %v1115 = vpack.c.b16 %v933, %v931
        %v1116 = vpack.c.b16 %v934, %v932
        %v1117 = vpack.c.b16 %v937, %v935
        %v1118 = vpack.c.b16 %v938, %v936
        %v1119 = vpack.c.b16 %v941, %v939
        %v1120 = vpack.c.b16 %v942, %v940
        %v1121 = vpack.c.b16 %v945, %v943
        %v1122 = vpack.c.b16 %v946, %v944
        %v1123 = vpack.c.b16 %v949, %v947
        %v1124 = vpack.c.b16 %v950, %v948
        %v1125 = vpack.c.b16 %v953, %v951
        %v1126 = vpack.c.b16 %v954, %v952
        %v1127 = vpack.c.b16 %v957, %v955
        %v1128 = vpack.c.b16 %v958, %v956
        %v1129 = vpack.c.b16 %v961, %v959
        %v1130 = vpack.c.b16 %v962, %v960
        %v1131 = vpack.c.b16 %v965, %v963
        %v1132 = vpack.c.b16 %v966, %v964
        %v1133 = vpack.c.b16 %v969, %v967
        %v1134 = vpack.c.b16 %v970, %v968
        %v1135 = vpack.c.b16 %v973, %v971
        %v1136 = vpack.c.b16 %v974, %v972
        %v1137 = vpack.c.b16 %v977, %v975
        %v1138 = vpack.c.b16 %v978, %v976
        %v1139 = vpack.c.b16 %v981, %v979
        %v1140 = vpack.c.b16 %v982, %v980
        %v1141 = vpack.c.b16 %v985, %v983
        %v1142 = vpack.c.b16 %v986, %v984
        %v1143 = vpack.c.b16 %v989, %v987
        %v1144 = vpack.c.b16 %v990, %v988
        %v1145 = vpack.c.b16 %v993, %v991
        %v1146 = vpack.c.b16 %v994, %v992
        %v1147 = vpack.c.b16 %v997, %v995
        %v1148 = vpack.c.b16 %v998, %v996
        %v1149 = vpack.c.b16 %v1001, %v999
        %v1150 = vpack.c.b16 %v1002, %v1000
        %v1151 = vpack.c.b16 %v1005, %v1003
        %v1152 = vpack.c.b16 %v1006, %v1004
        %v1153 = vpack.c.b16 %v1009, %v1007
        %v1154 = vpack.c.b16 %v1010, %v1008
        %1299 = vmatpush.bf16.msra.mxu0 %v1025
        %1300 = vmatpush.bf16.msra.mxu0 %v1023
        %1301 = vmatpush.bf16.msra.mxu0 %v1021
        %1302 = vmatpush.bf16.msra.mxu0 %v1019
        %1303 = vmatpush.bf16.msra.mxu0 %v1017
        %1304 = vmatpush.bf16.msra.mxu0 %v1015
        %1305 = vmatpush.bf16.msra.mxu0 %v1013
        %1306 = vmatpush.bf16.msra.mxu0 %v1011
        %1307 = vmatmul.bf16.gmra.mxu0 %v557
        %v1308 = vpop.f32.mrf.mxu0
        %v1309 = vadd.f32 %v550, %v1308
        %v1310 = vpop.f32.mrf.mxu0
        %1311 = vdwg.mxu0
        %1312 = vmatpush.bf16.msra.mxu0 %v1041
        %1313 = vmatpush.bf16.msra.mxu0 %v1039
        %1314 = vmatpush.bf16.msra.mxu0 %v1037
        %1315 = vmatpush.bf16.msra.mxu0 %v1035
        %1316 = vmatpush.bf16.msra.mxu0 %v1033
        %1317 = vmatpush.bf16.msra.mxu0 %v1031
        %1318 = vmatpush.bf16.msra.mxu0 %v1029
        %1319 = vmatpush.bf16.msra.mxu0 %v1027
        %1320 = vmatmul.bf16.gmra.mxu0 %v558
        %v1321 = vpop.f32.mrf.mxu0
        %v1322 = vadd.f32 %v1309, %v1321
        %v1323 = vpop.f32.mrf.mxu0
        %1324 = vdwg.mxu0
        %1325 = vmatpush.bf16.msra.mxu0 %v1057
        %1326 = vmatpush.bf16.msra.mxu0 %v1055
        %1327 = vmatpush.bf16.msra.mxu0 %v1053
        %1328 = vmatpush.bf16.msra.mxu0 %v1051
        %1329 = vmatpush.bf16.msra.mxu0 %v1049
        %1330 = vmatpush.bf16.msra.mxu0 %v1047
        %1331 = vmatpush.bf16.msra.mxu0 %v1045
        %1332 = vmatpush.bf16.msra.mxu0 %v1043
        %1333 = vmatmul.bf16.gmra.mxu0 %v559
        %v1334 = vpop.f32.mrf.mxu0
        %v1335 = vadd.f32 %v1322, %v1334
        %v1336 = vpop.f32.mrf.mxu0
        %1337 = vdwg.mxu0
        %1338 = vmatpush.bf16.msra.mxu0 %v1073
        %1339 = vmatpush.bf16.msra.mxu0 %v1071
        %1340 = vmatpush.bf16.msra.mxu0 %v1069
        %1341 = vmatpush.bf16.msra.mxu0 %v1067
        %1342 = vmatpush.bf16.msra.mxu0 %v1065
        %1343 = vmatpush.bf16.msra.mxu0 %v1063
        %1344 = vmatpush.bf16.msra.mxu0 %v1061
        %1345 = vmatpush.bf16.msra.mxu0 %v1059
        %1346 = vmatmul.bf16.gmra.mxu0 %v560
        %v1347 = vpop.f32.mrf.mxu0
        %v1348 = vadd.f32 %v1335, %v1347
        %v1349 = vpop.f32.mrf.mxu0
        %1350 = vdwg.mxu0
        %1351 = vmatpush.bf16.msra.mxu0 %v1089
        %1352 = vmatpush.bf16.msra.mxu0 %v1087
        %1353 = vmatpush.bf16.msra.mxu0 %v1085
        %1354 = vmatpush.bf16.msra.mxu0 %v1083
        %1355 = vmatpush.bf16.msra.mxu0 %v1081
        %1356 = vmatpush.bf16.msra.mxu0 %v1079
        %1357 = vmatpush.bf16.msra.mxu0 %v1077
        %1358 = vmatpush.bf16.msra.mxu0 %v1075
        %1359 = vmatmul.bf16.gmra.mxu0 %v561
        %v1360 = vpop.f32.mrf.mxu0
        %v1361 = vadd.f32 %v1348, %v1360
        %v1362 = vpop.f32.mrf.mxu0
        %1363 = vdwg.mxu0
        %1364 = vmatpush.bf16.msra.mxu0 %v1105
        %1365 = vmatpush.bf16.msra.mxu0 %v1103
        %1366 = vmatpush.bf16.msra.mxu0 %v1101
        %1367 = vmatpush.bf16.msra.mxu0 %v1099
        %1368 = vmatpush.bf16.msra.mxu0 %v1097
        %1369 = vmatpush.bf16.msra.mxu0 %v1095
        %1370 = vmatpush.bf16.msra.mxu0 %v1093
        %1371 = vmatpush.bf16.msra.mxu0 %v1091
        %1372 = vmatmul.bf16.gmra.mxu0 %v562
        %v1373 = vpop.f32.mrf.mxu0
        %v1374 = vadd.f32 %v1361, %v1373
        %v1375 = vpop.f32.mrf.mxu0
        %1376 = vdwg.mxu0
        %1377 = vmatpush.bf16.msra.mxu0 %v1121
        %1378 = vmatpush.bf16.msra.mxu0 %v1119
        %1379 = vmatpush.bf16.msra.mxu0 %v1117
        %1380 = vmatpush.bf16.msra.mxu0 %v1115
        %1381 = vmatpush.bf16.msra.mxu0 %v1113
        %1382 = vmatpush.bf16.msra.mxu0 %v1111
        %1383 = vmatpush.bf16.msra.mxu0 %v1109
        %1384 = vmatpush.bf16.msra.mxu0 %v1107
        %1385 = vmatmul.bf16.gmra.mxu0 %v563
        %v1386 = vpop.f32.mrf.mxu0
        %v1387 = vadd.f32 %v1374, %v1386
        %v1388 = vpop.f32.mrf.mxu0
        %1389 = vdwg.mxu0
        %1390 = vmatpush.bf16.msra.mxu0 %v1137
        %1391 = vmatpush.bf16.msra.mxu0 %v1135
        %1392 = vmatpush.bf16.msra.mxu0 %v1133
        %1393 = vmatpush.bf16.msra.mxu0 %v1131
        %1394 = vmatpush.bf16.msra.mxu0 %v1129
        %1395 = vmatpush.bf16.msra.mxu0 %v1127
        %1396 = vmatpush.bf16.msra.mxu0 %v1125
        %1397 = vmatpush.bf16.msra.mxu0 %v1123
        %1398 = vmatmul.bf16.gmra.mxu0 %v564
        %v1399 = vpop.f32.mrf.mxu0
        %v1400 = vadd.f32 %v1387, %v1399
        %v1401 = vpop.f32.mrf.mxu0
        %1402 = vdwg.mxu0
        %1403 = vmatpush.bf16.msra.mxu0 %v1153
        %1404 = vmatpush.bf16.msra.mxu0 %v1151
        %1405 = vmatpush.bf16.msra.mxu0 %v1149
        %1406 = vmatpush.bf16.msra.mxu0 %v1147
        %1407 = vmatpush.bf16.msra.mxu0 %v1145
        %1408 = vmatpush.bf16.msra.mxu0 %v1143
        %1409 = vmatpush.bf16.msra.mxu0 %v1141
        %1410 = vmatpush.bf16.msra.mxu0 %v1139
        %1411 = vmatmul.bf16.gmra.mxu0 %v569
        %v1412 = vpop.f32.mrf.mxu0
        %v1413 = vadd.f32 %v1400, %v1412
        %v1414 = vpop.f32.mrf.mxu0
        %1415 = vdwg.mxu0
        %1416 = vmatpush.bf16.msra.mxu0 %v1026
        %1417 = vmatpush.bf16.msra.mxu0 %v1024
        %1418 = vmatpush.bf16.msra.mxu0 %v1022
        %1419 = vmatpush.bf16.msra.mxu0 %v1020
        %1420 = vmatpush.bf16.msra.mxu0 %v1018
        %1421 = vmatpush.bf16.msra.mxu0 %v1016
        %1422 = vmatpush.bf16.msra.mxu0 %v1014
        %1423 = vmatpush.bf16.msra.mxu0 %v1012
        %1424 = vmatmul.bf16.gmra.mxu0 %v557
        %v1425 = vpop.f32.mrf.mxu0
        %v1426 = vadd.f32 %v551, %v1425
        %v1427 = vpop.f32.mrf.mxu0
        %1428 = vdwg.mxu0
        %1429 = vmatpush.bf16.msra.mxu0 %v1042
        %1430 = vmatpush.bf16.msra.mxu0 %v1040
        %1431 = vmatpush.bf16.msra.mxu0 %v1038
        %1432 = vmatpush.bf16.msra.mxu0 %v1036
        %1433 = vmatpush.bf16.msra.mxu0 %v1034
        %1434 = vmatpush.bf16.msra.mxu0 %v1032
        %1435 = vmatpush.bf16.msra.mxu0 %v1030
        %1436 = vmatpush.bf16.msra.mxu0 %v1028
        %1437 = vmatmul.bf16.gmra.mxu0 %v558
        %v1438 = vpop.f32.mrf.mxu0
        %v1439 = vadd.f32 %v1426, %v1438
        %v1440 = vpop.f32.mrf.mxu0
        %1441 = vdwg.mxu0
        %1442 = vmatpush.bf16.msra.mxu0 %v1058
        %1443 = vmatpush.bf16.msra.mxu0 %v1056
        %1444 = vmatpush.bf16.msra.mxu0 %v1054
        %1445 = vmatpush.bf16.msra.mxu0 %v1052
        %1446 = vmatpush.bf16.msra.mxu0 %v1050
        %1447 = vmatpush.bf16.msra.mxu0 %v1048
        %1448 = vmatpush.bf16.msra.mxu0 %v1046
        %1449 = vmatpush.bf16.msra.mxu0 %v1044
        %1450 = vmatmul.bf16.gmra.mxu0 %v559
        %v1451 = vpop.f32.mrf.mxu0
        %v1452 = vadd.f32 %v1439, %v1451
        %v1453 = vpop.f32.mrf.mxu0
        %1454 = vdwg.mxu0
        %1455 = vmatpush.bf16.msra.mxu0 %v1074
        %1456 = vmatpush.bf16.msra.mxu0 %v1072
        %1457 = vmatpush.bf16.msra.mxu0 %v1070
        %1458 = vmatpush.bf16.msra.mxu0 %v1068
        %1459 = vmatpush.bf16.msra.mxu0 %v1066
        %1460 = vmatpush.bf16.msra.mxu0 %v1064
        %1461 = vmatpush.bf16.msra.mxu0 %v1062
        %1462 = vmatpush.bf16.msra.mxu0 %v1060
        %1463 = vmatmul.bf16.gmra.mxu0 %v560
        %v1464 = vpop.f32.mrf.mxu0
        %v1465 = vadd.f32 %v1452, %v1464
        %v1466 = vpop.f32.mrf.mxu0
        %1467 = vdwg.mxu0
        %1468 = vmatpush.bf16.msra.mxu0 %v1090
        %1469 = vmatpush.bf16.msra.mxu0 %v1088
        %1470 = vmatpush.bf16.msra.mxu0 %v1086
        %1471 = vmatpush.bf16.msra.mxu0 %v1084
        %1472 = vmatpush.bf16.msra.mxu0 %v1082
        %1473 = vmatpush.bf16.msra.mxu0 %v1080
        %1474 = vmatpush.bf16.msra.mxu0 %v1078
        %1475 = vmatpush.bf16.msra.mxu0 %v1076
        %1476 = vmatmul.bf16.gmra.mxu0 %v561
        %v1477 = vpop.f32.mrf.mxu0
        %v1478 = vadd.f32 %v1465, %v1477
        %v1479 = vpop.f32.mrf.mxu0
        %1480 = vdwg.mxu0
        %1481 = vmatpush.bf16.msra.mxu0 %v1106
        %1482 = vmatpush.bf16.msra.mxu0 %v1104
        %1483 = vmatpush.bf16.msra.mxu0 %v1102
        %1484 = vmatpush.bf16.msra.mxu0 %v1100
        %1485 = vmatpush.bf16.msra.mxu0 %v1098
        %1486 = vmatpush.bf16.msra.mxu0 %v1096
        %1487 = vmatpush.bf16.msra.mxu0 %v1094
        %1488 = vmatpush.bf16.msra.mxu0 %v1092
        %1489 = vmatmul.bf16.gmra.mxu0 %v562
        %v1490 = vpop.f32.mrf.mxu0
        %v1491 = vadd.f32 %v1478, %v1490
        %v1492 = vpop.f32.mrf.mxu0
        %1493 = vdwg.mxu0
        %1494 = vmatpush.bf16.msra.mxu0 %v1122
        %1495 = vmatpush.bf16.msra.mxu0 %v1120
        %1496 = vmatpush.bf16.msra.mxu0 %v1118
        %1497 = vmatpush.bf16.msra.mxu0 %v1116
        %1498 = vmatpush.bf16.msra.mxu0 %v1114
        %1499 = vmatpush.bf16.msra.mxu0 %v1112
        %1500 = vmatpush.bf16.msra.mxu0 %v1110
        %1501 = vmatpush.bf16.msra.mxu0 %v1108
        %1502 = vmatmul.bf16.gmra.mxu0 %v563
        %v1503 = vpop.f32.mrf.mxu0
        %v1504 = vadd.f32 %v1491, %v1503
        %v1505 = vpop.f32.mrf.mxu0
        %1506 = vdwg.mxu0
        %1507 = vmatpush.bf16.msra.mxu0 %v1138
        %1508 = vmatpush.bf16.msra.mxu0 %v1136
        %1509 = vmatpush.bf16.msra.mxu0 %v1134
        %1510 = vmatpush.bf16.msra.mxu0 %v1132
        %1511 = vmatpush.bf16.msra.mxu0 %v1130
        %1512 = vmatpush.bf16.msra.mxu0 %v1128
        %1513 = vmatpush.bf16.msra.mxu0 %v1126
        %1514 = vmatpush.bf16.msra.mxu0 %v1124
        %1515 = vmatmul.bf16.gmra.mxu0 %v564
        %v1516 = vpop.f32.mrf.mxu0
        %v1517 = vadd.f32 %v1504, %v1516
        %v1518 = vpop.f32.mrf.mxu0
        %1519 = vdwg.mxu0
        %1520 = vmatpush.bf16.msra.mxu0 %v1154
        %1521 = vmatpush.bf16.msra.mxu0 %v1152
        %1522 = vmatpush.bf16.msra.mxu0 %v1150
        %1523 = vmatpush.bf16.msra.mxu0 %v1148
        %1524 = vmatpush.bf16.msra.mxu0 %v1146
        %1525 = vmatpush.bf16.msra.mxu0 %v1144
        %1526 = vmatpush.bf16.msra.mxu0 %v1142
        %1527 = vmatpush.bf16.msra.mxu0 %v1140
        %1528 = vmatmul.bf16.gmra.mxu0 %v569
        %v1529 = vpop.f32.mrf.mxu0
        %v1530 = vadd.f32 %v1517, %v1529
        %v1531 = vpop.f32.mrf.mxu0
        %1532 = vdwg.mxu0
        %vm1533 = vcmp.gt.f32.partialorder %v1413, 0.0
        %vm1534 = vcmp.gt.f32.partialorder %v1530, 0.0
        %v1535 = vmul.f32 %v1413, 1.442695
        %v1536 = vpow.pop %v1535
        %v1537 = vmul.f32 %v1530, 1.442695
        %v1538 = vpow.pop %v1537
        %v1539 = vsub.f32 %v1536, 1.0
        %v1540 = vsub.f32 %v1538, 1.0
        %v1541 = vsel %vm1533, %v1413, %v1539
        %v1542 = vsel %vm1534, %v1530, %v1540
        %v1545 = vrot.slane %v1542, 6
        %v1546 = vsel %vm376, %v1541, %v1545
        %vm1547 = vcmask 1043458
        %v1548 = vsel %vm1547, %v1541, %v1545
        %v1549 = vrot.slane %v1548, 2
        %1550 = vst [vmem:[#allocation1] ss:$4 sm:$0xff] %v1546
        %v1551 = vld.sshfl [vmem:[#allocation1] sm:$0xff pattern:$0x73625140]
        %v1552 = vld.sshfl [vmem:[#allocation1 + $0x8] sm:$0xff pattern:$0x73625140]
        %s1553 = scalar_lea.vmem [#allocation1], 32
        %1554 = vst [vmem:[%s1553] ss:$4 sm:$0xff] %v1549
        %v1555 = vld.sshfl [vmem:[#allocation1 + $0x20] sm:$0xff pattern:$0x73625140]
        %v1556 = vld.sshfl [vmem:[#allocation1 + $0x28] sm:$0xff pattern:$0x73625140]
        %v1561 = vpack.c.bf16 %v1552, %v1551
        %v1562 = vpack.c.bf16 %v1556, %v1555
        %v1565 = vrot.slane %v1561, 3
        %v1566 = vrot.slane %v1562, 3
        %v1569 = vsel %vm369, %v1561, %v1565
        %v1572 = vsel %vm369, %v1562, %v1566
        %1575 = vst [vmem:[%s220] sm:$0x3] %v1569
        %1576 = vst [vmem:[%s220 + $0x2] sm:$0x3] %v1572
        %s1577 = sand.u32 %s97, 1
        %s1578 = scalar_lea.sflag [#allocation4], %s1577
        %s1579 = sand.u32 %s97, 1
        %s1580 = smul.addr %s1579, 4
        %s1581 = scalar_lea.vmem [#allocation8], %s1580
        // Predicated region
        $region45: #{tpu_custom_call.1} parent=31 // pred_check
          %p1582 = pneg %p107
        $region46: #{tpu_custom_call.1} parent=31 // pred_check_branch
          %1584 = sbr.rel (%p1582) target = $region48
        $region47: #{tpu_custom_call.1} parent=31 // pred_region
          %1586 = vsyncadd %s1578, 0
          %s1587 = smul.addr %s21, 4
          %s1588 = scalar_lea.hbm %s3, %s1587
          %s1589 = sshll.u32 %s1581, 4
          %s1590 = int_to_ptr.vmem [resolvable:$true] %s1589
          %s1591 = sshll.u32 %s1588, 4
          %s1592 = int_to_ptr.hbm [resolvable:$true] %s1591
          %1597 = dma.vmem_to_hbm [thread:$0]  %s1590, 64, %s1592, %s1578, 32, 32, 2
        $region48: #{tpu_custom_call.1} parent=31 // pred_fallthru
          _
      $region32: #{tpu_custom_call.1} parent=5 // pred_fallthru
        _
      %p1598 = scmp.le.s32.totalorder 2, %s16
      // Predicated region
      $region49: #{tpu_custom_call.1} parent=5 // pred_check
        %p1599 = pneg %p1598
      $region50: #{tpu_custom_call.1} parent=5 // pred_check_branch
        %1601 = sbr.rel (%p1599) target = $region52
      $region51: #{tpu_custom_call.1} parent=5 // pred_region
        %s1602 = ssub.s32 %s16, 2
        // Predicated region
        $region53: #{tpu_custom_call.1} parent=51 // pred_check
          %p1603 = pneg %p113
        $region54: #{tpu_custom_call.1} parent=51 // pred_check_branch
          %1605 = sbr.rel (%p1603) target = $region56
        $region55: #{tpu_custom_call.1} parent=51 // pred_region
          %s1606 = sand.u32 %s98, 1
          %s1607 = scalar_lea.sflag [#allocation4], %s1606
          %s1608 = sand.u32 %s98, 1
          %s1609 = smul.addr %s1608, 4
          %s1610 = scalar_lea.vmem [#allocation8], %s1609
          %1612 = dma.done %s1607, 64
        $region56: #{tpu_custom_call.1} parent=51 // pred_fallthru
          _
      $region52: #{tpu_custom_call.1} parent=5 // pred_fallthru
        _
    $region6: #{tpu_custom_call.1} parent=1 // loop_footer
      %s20 = sadd.s32 1, %s16
    $region7: #{tpu_custom_call.1} parent=1 // loop_footer_branch
      %15 = sbr.rel target = $region3
    $region8: #{tpu_custom_call.1} parent=1 // loop_exit
      _
    %1613 = vsyncpa [#allocation3], 1
    %s1614 = scalar_lea.sflag [#allocation3], 1
    %1615 = vsyncpa %s1614, 1
    %1616 = vsyncpa [#allocation6], 1
    %1617 = vsyncpa [#allocation4], 1
    %s1618 = scalar_lea.sflag [#allocation4], 1
    %1619 = vsyncpa %s1618, 1

</llo_original>
